<compile_context>
chip_gen: v7x
topology: tpu7x:2x2x1
jax: 0.10.0
libtpu: 0.0.40
codegen_flags: <defaults>
</compile_context>

<pallas_src>
import jax
import jax.numpy as jnp
from jax.experimental import pallas as pl
from jax.experimental.pallas import tpu as pltpu


LANE = 128               # feature (lane) dims padded to multiples of this
SUBLANE = 8              # f32 sublane packing; batch tiles are multiples of 8
MAX_BM_CAP = 512         # absolute cap on the batch-tile height
VMEM_FALLBACK = 64 * 2 ** 20   # conservative (v7x-sized) if query fails


def _round_up(x, m):
    return ((x + m - 1) // m) * m


def _cdiv(a, b):
    return -(-a // b)


def _vmem_capacity_bytes():
    try:
        return int(pltpu.get_tpu_info().vmem_capacity_bytes)
    except Exception:
        return VMEM_FALLBACK


def encoder_mlp_kernel(x_ref, w1_ref, b1_ref, w2_ref, b2_ref,
                       w3_ref, b3_ref, w4_ref, b4_ref,
                       emb_ref, sum_ref):
    """One batch tile: mlp (Linear-ReLU-Linear) then summarizer (Linear-ReLU-Linear).

    Matmuls run in the weight dtype (bf16 weights -> native-rate bf16 MXU
    passes) with f32 accumulation; bias-add / ReLU happen on the f32
    accumulator on the VPU.
    """
    x = x_ref[...].astype(w1_ref.dtype)

    # self.mlp: Linear -> ReLU -> Linear
    h = jnp.dot(x, w1_ref[...], preferred_element_type=jnp.float32)
    h = jnp.maximum(h + b1_ref[...].astype(jnp.float32), 0.0)
    # TODO(synk): for very large nhid, chunk this N dimension and accumulate
    # straight into emb so the full f32 h never materializes (v7x VMEM).
    emb = jnp.dot(h.astype(w2_ref.dtype), w2_ref[...],
                  preferred_element_type=jnp.float32)
    emb = emb + b2_ref[...].astype(jnp.float32)
    emb_ref[...] = emb.astype(emb_ref.dtype)

    # self.summarizer: Linear -> ReLU -> Linear (consumes the f32 accumulator)
    h2 = jnp.dot(emb.astype(w3_ref.dtype), w3_ref[...],
                 preferred_element_type=jnp.float32)
    h2 = jnp.maximum(h2 + b3_ref[...].astype(jnp.float32), 0.0)
    summ = jnp.dot(h2.astype(w4_ref.dtype), w4_ref[...],
                   preferred_element_type=jnp.float32)
    summ = summ + b4_ref[...].astype(jnp.float32)
    sum_ref[...] = summ.astype(sum_ref.dtype)


def pad_params(params, dtype=None):
    """Zero-pad every Linear so all feature (lane) dims are multiples of 128.

    Done ONCE outside the kernel; zero padding does not change the math.
    Optionally cast weights/biases (e.g. jnp.bfloat16 for native MXU rate).
    """
    def maybe_cast(a):
        return a.astype(dtype) if dtype is not None else a

    def pad_w(w):
        k, n = w.shape
        return maybe_cast(jnp.pad(w, ((0, _round_up(k, LANE) - k),
                                      (0, _round_up(n, LANE) - n))))

    def pad_b(bv):
        n = bv.shape[-1]
        return maybe_cast(jnp.pad(bv.reshape(1, n),
                                  ((0, 0), (0, _round_up(n, LANE) - n))))

    w1, b1, w2, b2, w3, b3, w4, b4 = params
    return (pad_w(w1), pad_b(b1), pad_w(w2), pad_b(b2),
            pad_w(w3), pad_b(b3), pad_w(w4), pad_b(b4))


def encoder_mlp_forward(inputs, padded_params, nout):
    """inputs: (seq_len, batch, ninp) -> (embeddings (s,b,nout), summary (1,b,nout))."""
    s, b, d = inputs.shape
    w1p, b1p, w2p, b2p, w3p, b3p, w4p, b4p = padded_params
    k1p = w1p.shape[0]           # padded s*ninp
    hp = w1p.shape[1]            # padded nhid
    n2p = w2p.shape[1]           # padded s*nout
    hsp = w3p.shape[1]           # padded summarizer hidden (nout)
    n4p = w4p.shape[1]           # padded nout

    # Flatten sequence into the lane dimension: (s,b,d) -> (b, s*d).
    # TODO(synk): fold this permute/pad into the kernel (extra "arbitrary" grid
    # axis over s + f32 accumulator) to drop one XLA HBM pass over the inputs.
    x = jnp.transpose(inputs, (1, 0, 2)).reshape(b, s * d)

    # ---- generation-aware tile / VMEM sizing --------------------------------
    itemsize = jnp.dtype(inputs.dtype).itemsize
    weight_bytes = sum(int(a.size) * a.dtype.itemsize for a in padded_params)
    # Per batch-row VMEM cost: double-buffered streamed x/emb/summary tiles
    # plus the f32 intermediates (h, emb, h2, summ).
    per_row = 2 * (k1p + n2p + n4p) * itemsize + (hp + n2p + hsp + n4p) * 4
    headroom = 2 * 2 ** 20                       # Mosaic internal-scratch slack

    vmem_cap = _vmem_capacity_bytes()
    budget = int(0.75 * vmem_cap)
    avail = budget - weight_bytes - headroom
    # TODO(synk): add a weight-tiling fallback (grid axis over nhid with an f32
    # accumulator scratch) when the resident weights alone exceed the budget.
    max_bm = max(SUBLANE, min(MAX_BM_CAP, (avail // per_row) // SUBLANE * SUBLANE))

    # Balanced batch tiles: minimize row padding and prefer >= 2 grid steps so
    # dual-TensorCore parts (v7x) can split the "parallel" axis across cores.
    b_round = _round_up(b, SUBLANE)
    num_tiles = _cdiv(b_round, max_bm)
    if num_tiles < 2 and b_round >= 2 * SUBLANE:
        num_tiles = 2
    bm = _round_up(_cdiv(b_round, num_tiles), SUBLANE)
    b_pad = bm * num_tiles

    x = jnp.pad(x, ((0, b_pad - b), (0, k1p - s * d)))

    def run(single_buffer_weights):
        weight_factor = 1 if single_buffer_weights else 2
        footprint = weight_factor * weight_bytes + bm * per_row + headroom
        vmem_limit = int(min(0.9 * vmem_cap, max(footprint, 32 * 2 ** 20)))

        def resident(arr):      # grid-invariant weights/biases stay in VMEM
            nd = arr.ndim
            index_map = lambda i: (0,) * nd
            if single_buffer_weights:
                return pl.BlockSpec(arr.shape, index_map,
                                    pipeline_mode=pl.Buffered(1))
            return pl.BlockSpec(arr.shape, index_map)

        out = pl.pallas_call(
            encoder_mlp_kernel,
            grid=(num_tiles,),
            in_specs=[pl.BlockSpec((bm, k1p), lambda i: (i, 0))]      # streamed x
                     + [resident(a) for a in padded_params],
            out_specs=[
                pl.BlockSpec((bm, n2p), lambda i: (i, 0)),   # lane-dense emb slab
                pl.BlockSpec((bm, n4p), lambda i: (i, 0)),   # lane-dense summary
            ],
            out_shape=[
                jax.ShapeDtypeStruct((b_pad, n2p), inputs.dtype),
                jax.ShapeDtypeStruct((b_pad, n4p), inputs.dtype),
            ],
            compiler_params=pltpu.CompilerParams(
                dimension_semantics=("parallel",),
                vmem_limit_bytes=vmem_limit,
            ),
        )(x, *padded_params)
        return jax.block_until_ready(out)

    try:
        emb_flat, summary_flat = run(single_buffer_weights=True)
    except Exception:
        # pipeline_mode=pl.Buffered(1) not supported on this jax/libtpu build:
        # fall back to default double-buffered resident weights.
        emb_flat, summary_flat = run(single_buffer_weights=False)

    # Strip padding; (b, s*nout) -> (b, s, nout) -> (s, b, nout).
    # TODO(synk): emit a lane-dense (s, bm, nout_pad) 3-D embeddings block from
    # inside the kernel to drop this XLA transpose pass over the largest output.
    embeddings = jnp.transpose(
        emb_flat[:b, :s * nout].reshape(b, s, nout), (1, 0, 2))
    summary = summary_flat[:b, :nout][None, :, :]        # (1, b, nout)
    return embeddings, summary


def init_params(key, ninp, nout, seq_len, nhid):
    """PyTorch nn.Linear-style uniform(-1/sqrt(fan_in), 1/sqrt(fan_in)) init."""
    def linear(k, fan_in, fan_out):
        kw, kb = jax.random.split(k)
        bound = 1.0 / (fan_in ** 0.5)
        w = jax.random.uniform(kw, (fan_in, fan_out), jnp.float32, -bound, bound)
        b = jax.random.uniform(kb, (1, fan_out), jnp.float32, -bound, bound)
        return w, b

    k1, k2, k3, k4 = jax.random.split(key, 4)
    w1, b1 = linear(k1, seq_len * ninp, nhid)           # mlp layer 0
    w2, b2 = linear(k2, nhid, seq_len * nout)           # mlp output layer
    w3, b3 = linear(k3, seq_len * nout, nout)           # summarizer layer 0
    w4, b4 = linear(k4, nout, nout)                     # summarizer output layer
    return (w1, b1, w2, b2, w3, b3, w4, b4)


def reference_forward(inputs, params, nout):
    """Pure-JAX reference of the PyTorch forward (dropout=0)."""
    s, b, d = inputs.shape
    x = jnp.transpose(inputs, (1, 0, 2)).reshape(b, s * d)
    w1, b1, w2, b2, w3, b3, w4, b4 = params
    h = jnp.maximum(x @ w1 + b1, 0.0)
    emb = h @ w2 + b2
    h2 = jnp.maximum(emb @ w3 + b3, 0.0)
    summ = h2 @ w4 + b4
    return jnp.transpose(emb.reshape(b, s, nout), (1, 0, 2)), summ[None]


if __name__ == "__main__":
    # Small shapes consistent with the module's forward.
    seq_len, batch, ninp = 8, 2, 4
    nout, nhid = 4, 32

    key = jax.random.PRNGKey(0)
    k_in, k_p, k_in2 = jax.random.split(key, 3)
    inputs = jax.random.normal(k_in, (seq_len, batch, ninp), jnp.float32)
    params = init_params(k_p, ninp, nout, seq_len, nhid)

    # TODO(synk): dropout is a no-op here (dropout=0 / inference semantics).
    padded_f32 = pad_params(params)                     # exact f32 path
    embeddings, summary = encoder_mlp_forward(inputs, padded_f32, nout)
    jax.block_until_ready((embeddings, summary))

    ref_emb, ref_sum = reference_forward(inputs, params, nout)
    assert embeddings.shape == (seq_len, batch, nout)
    assert summary.shape == (1, batch, nout)
    assert jnp.allclose(embeddings, ref_emb, atol=1e-5, rtol=1e-5)
    assert jnp.allclose(summary, ref_sum, atol=1e-5, rtol=1e-5)

    # Second config: multi-step, balanced batch grid (bm=80, 2 equal tiles).
    batch2 = 160
    inputs2 = jax.random.normal(k_in2, (seq_len, batch2, ninp), jnp.float32)
    emb2, sum2 = encoder_mlp_forward(inputs2, padded_f32, nout)
    jax.block_until_ready((emb2, sum2))
    ref_emb2, ref_sum2 = reference_forward(inputs2, params, nout)
    assert emb2.shape == (seq_len, batch2, nout)
    assert sum2.shape == (1, batch2, nout)
    assert jnp.allclose(emb2, ref_emb2, atol=1e-5, rtol=1e-5)
    assert jnp.allclose(sum2, ref_sum2, atol=1e-5, rtol=1e-5)

    # Third config: bf16-stored weights -> native-rate MXU passes with f32
    # accumulation (looser tolerance vs. the f32 reference).
    padded_bf16 = pad_params(params, dtype=jnp.bfloat16)
    emb_bf, sum_bf = encoder_mlp_forward(inputs2, padded_bf16, nout)
    jax.block_until_ready((emb_bf, sum_bf))
    assert jnp.allclose(emb_bf, ref_emb2, atol=5e-2, rtol=5e-2)
    assert jnp.allclose(sum_bf, ref_sum2, atol=5e-2, rtol=5e-2)

    print("KERNEL_OK")
</pallas_src>

<mosaic_0001>
module attributes {stable_mosaic.version = 11 : i64} {
  func.func @encoder_mlp_kernel(%arg0: i32, %arg1: memref<8x128xf32, #tpu.memory_space<vmem>>, %arg2: memref<128x128xf32, #tpu.memory_space<vmem>>, %arg3: memref<1x128xf32, #tpu.memory_space<vmem>>, %arg4: memref<128x128xf32, #tpu.memory_space<vmem>>, %arg5: memref<1x128xf32, #tpu.memory_space<vmem>>, %arg6: memref<128x128xf32, #tpu.memory_space<vmem>>, %arg7: memref<1x128xf32, #tpu.memory_space<vmem>>, %arg8: memref<128x128xf32, #tpu.memory_space<vmem>>, %arg9: memref<1x128xf32, #tpu.memory_space<vmem>>, %arg10: memref<8x128xf32, #tpu.memory_space<vmem>>, %arg11: memref<8x128xf32, #tpu.memory_space<vmem>>) attributes {dimension_semantics = [#tpu.dimension_semantics<parallel>], iteration_bounds = array<i64: 1>, scalar_prefetch = 0 : i64, scratch_operands = 0 : i64, tpu.core_type = #tpu.core_type<tc>, window_params = [{transform_indices = @transform_0, window_bounds = array<i64: 8, 128>}, {pipeline_mode = #tpu.pipeline_mode<synchronous>, transform_indices = @transform_1, window_bounds = array<i64: 128, 128>}, {pipeline_mode = #tpu.pipeline_mode<synchronous>, transform_indices = @transform_2, window_bounds = array<i64: 1, 128>}, {pipeline_mode = #tpu.pipeline_mode<synchronous>, transform_indices = @transform_3, window_bounds = array<i64: 128, 128>}, {pipeline_mode = #tpu.pipeline_mode<synchronous>, transform_indices = @transform_4, window_bounds = array<i64: 1, 128>}, {pipeline_mode = #tpu.pipeline_mode<synchronous>, transform_indices = @transform_5, window_bounds = array<i64: 128, 128>}, {pipeline_mode = #tpu.pipeline_mode<synchronous>, transform_indices = @transform_6, window_bounds = array<i64: 1, 128>}, {pipeline_mode = #tpu.pipeline_mode<synchronous>, transform_indices = @transform_7, window_bounds = array<i64: 128, 128>}, {pipeline_mode = #tpu.pipeline_mode<synchronous>, transform_indices = @transform_8, window_bounds = array<i64: 1, 128>}, {transform_indices = @transform_9, window_bounds = array<i64: 8, 128>}, {transform_indices = @transform_10, window_bounds = array<i64: 8, 128>}]} {
    %c0 = arith.constant 0 : index
    %c0_0 = arith.constant 0 : index
    %0 = vector.load %arg1[%c0, %c0_0] : memref<8x128xf32, #tpu.memory_space<vmem>>, vector<8x128xf32>
    %c0_1 = arith.constant 0 : index
    %c0_2 = arith.constant 0 : index
    %1 = vector.load %arg2[%c0_1, %c0_2] : memref<128x128xf32, #tpu.memory_space<vmem>>, vector<128x128xf32>
    %cst = arith.constant dense<0.000000e+00> : vector<8x128xf32>
    %2 = tpu.matmul %0, %1, %cst {dimension_numbers = #tpu.dot_dimension_numbers<[1], [0], [0], [1], [0, 0, 1, 1], [], []>} : vector<8x128xf32>, vector<128x128xf32>, vector<8x128xf32> -> vector<8x128xf32>
    %c0_3 = arith.constant 0 : index
    %c0_4 = arith.constant 0 : index
    %3 = vector.load %arg3[%c0_3, %c0_4] : memref<1x128xf32, #tpu.memory_space<vmem>>, vector<1x128xf32>
    %4 = vector.broadcast %3 : vector<1x128xf32> to vector<8x128xf32>
    %5 = arith.addf %2, %4 : vector<8x128xf32>
    %cst_5 = arith.constant 0.000000e+00 : f32
    %6 = vector.broadcast %cst_5 : f32 to vector<8x128xf32>
    %7 = arith.maximumf %5, %6 : vector<8x128xf32>
    %c0_6 = arith.constant 0 : index
    %c0_7 = arith.constant 0 : index
    %8 = vector.load %arg4[%c0_6, %c0_7] : memref<128x128xf32, #tpu.memory_space<vmem>>, vector<128x128xf32>
    %cst_8 = arith.constant dense<0.000000e+00> : vector<8x128xf32>
    %9 = tpu.matmul %7, %8, %cst_8 {dimension_numbers = #tpu.dot_dimension_numbers<[1], [0], [0], [1], [0, 0, 1, 1], [], []>} : vector<8x128xf32>, vector<128x128xf32>, vector<8x128xf32> -> vector<8x128xf32>
    %c0_9 = arith.constant 0 : index
    %c0_10 = arith.constant 0 : index
    %10 = vector.load %arg5[%c0_9, %c0_10] : memref<1x128xf32, #tpu.memory_space<vmem>>, vector<1x128xf32>
    %11 = vector.broadcast %10 : vector<1x128xf32> to vector<8x128xf32>
    %12 = arith.addf %9, %11 : vector<8x128xf32>
    %c0_11 = arith.constant 0 : index
    %c0_12 = arith.constant 0 : index
    %13 = vector.load %arg10[%c0_11, %c0_12] : memref<8x128xf32, #tpu.memory_space<vmem>>, vector<8x128xf32>
    tpu.vector_store %arg10[%c0_11, %c0_12], %12 {strides = array<i32>} : memref<8x128xf32, #tpu.memory_space<vmem>>, vector<8x128xf32>,
    %c0_13 = arith.constant 0 : index
    %c0_14 = arith.constant 0 : index
    %14 = vector.load %arg6[%c0_13, %c0_14] : memref<128x128xf32, #tpu.memory_space<vmem>>, vector<128x128xf32>
    %cst_15 = arith.constant dense<0.000000e+00> : vector<8x128xf32>
    %15 = tpu.matmul %12, %14, %cst_15 {dimension_numbers = #tpu.dot_dimension_numbers<[1], [0], [0], [1], [0, 0, 1, 1], [], []>} : vector<8x128xf32>, vector<128x128xf32>, vector<8x128xf32> -> vector<8x128xf32>
    %c0_16 = arith.constant 0 : index
    %c0_17 = arith.constant 0 : index
    %16 = vector.load %arg7[%c0_16, %c0_17] : memref<1x128xf32, #tpu.memory_space<vmem>>, vector<1x128xf32>
    %17 = vector.broadcast %16 : vector<1x128xf32> to vector<8x128xf32>
    %18 = arith.addf %15, %17 : vector<8x128xf32>
    %cst_18 = arith.constant 0.000000e+00 : f32
    %19 = vector.broadcast %cst_18 : f32 to vector<8x128xf32>
    %20 = arith.maximumf %18, %19 : vector<8x128xf32>
    %c0_19 = arith.constant 0 : index
    %c0_20 = arith.constant 0 : index
    %21 = vector.load %arg8[%c0_19, %c0_20] : memref<128x128xf32, #tpu.memory_space<vmem>>, vector<128x128xf32>
    %cst_21 = arith.constant dense<0.000000e+00> : vector<8x128xf32>
    %22 = tpu.matmul %20, %21, %cst_21 {dimension_numbers = #tpu.dot_dimension_numbers<[1], [0], [0], [1], [0, 0, 1, 1], [], []>} : vector<8x128xf32>, vector<128x128xf32>, vector<8x128xf32> -> vector<8x128xf32>
    %c0_22 = arith.constant 0 : index
    %c0_23 = arith.constant 0 : index
    %23 = vector.load %arg9[%c0_22, %c0_23] : memref<1x128xf32, #tpu.memory_space<vmem>>, vector<1x128xf32>
    %24 = vector.broadcast %23 : vector<1x128xf32> to vector<8x128xf32>
    %25 = arith.addf %22, %24 : vector<8x128xf32>
    %c0_24 = arith.constant 0 : index
    %c0_25 = arith.constant 0 : index
    %26 = vector.load %arg11[%c0_24, %c0_25] : memref<8x128xf32, #tpu.memory_space<vmem>>, vector<8x128xf32>
    tpu.vector_store %arg11[%c0_24, %c0_25], %25 {strides = array<i32>} : memref<8x128xf32, #tpu.memory_space<vmem>>, vector<8x128xf32>,
    return
  }
  func.func @transform_0(%arg0: i32) -> (i32, i32) {
    %c0_i32 = arith.constant 0 : i32
    %c0_i32_0 = arith.constant 0 : i32
    return %arg0, %c0_i32 : i32, i32
  }
  func.func @transform_1(%arg0: i32) -> (i32, i32) {
    %c0_i32 = arith.constant 0 : i32
    %c0_i32_0 = arith.constant 0 : i32
    %c0_i32_1 = arith.constant 0 : i32
    return %c0_i32, %c0_i32_0 : i32, i32
  }
  func.func @transform_2(%arg0: i32) -> (i32, i32) {
    %c0_i32 = arith.constant 0 : i32
    %c0_i32_0 = arith.constant 0 : i32
    %c0_i32_1 = arith.constant 0 : i32
    return %c0_i32, %c0_i32_0 : i32, i32
  }
  func.func @transform_3(%arg0: i32) -> (i32, i32) {
    %c0_i32 = arith.constant 0 : i32
    %c0_i32_0 = arith.constant 0 : i32
    %c0_i32_1 = arith.constant 0 : i32
    return %c0_i32, %c0_i32_0 : i32, i32
  }
  func.func @transform_4(%arg0: i32) -> (i32, i32) {
    %c0_i32 = arith.constant 0 : i32
    %c0_i32_0 = arith.constant 0 : i32
    %c0_i32_1 = arith.constant 0 : i32
    return %c0_i32, %c0_i32_0 : i32, i32
  }
  func.func @transform_5(%arg0: i32) -> (i32, i32) {
    %c0_i32 = arith.constant 0 : i32
    %c0_i32_0 = arith.constant 0 : i32
    %c0_i32_1 = arith.constant 0 : i32
    return %c0_i32, %c0_i32_0 : i32, i32
  }
  func.func @transform_6(%arg0: i32) -> (i32, i32) {
    %c0_i32 = arith.constant 0 : i32
    %c0_i32_0 = arith.constant 0 : i32
    %c0_i32_1 = arith.constant 0 : i32
    return %c0_i32, %c0_i32_0 : i32, i32
  }
  func.func @transform_7(%arg0: i32) -> (i32, i32) {
    %c0_i32 = arith.constant 0 : i32
    %c0_i32_0 = arith.constant 0 : i32
    %c0_i32_1 = arith.constant 0 : i32
    return %c0_i32, %c0_i32_0 : i32, i32
  }
  func.func @transform_8(%arg0: i32) -> (i32, i32) {
    %c0_i32 = arith.constant 0 : i32
    %c0_i32_0 = arith.constant 0 : i32
    %c0_i32_1 = arith.constant 0 : i32
    return %c0_i32, %c0_i32_0 : i32, i32
  }
  func.func @transform_9(%arg0: i32) -> (i32, i32) {
    %c0_i32 = arith.constant 0 : i32
    %c0_i32_0 = arith.constant 0 : i32
    return %arg0, %c0_i32 : i32, i32
  }
  func.func @transform_10(%arg0: i32) -> (i32, i32) {
    %c0_i32 = arith.constant 0 : i32
    %c0_i32_0 = arith.constant 0 : i32
    return %arg0, %c0_i32 : i32, i32
  }
}

module attributes {stable_mosaic.version = 11 : i64} {
  func.func @encoder_mlp_kernel(%arg0: i32, %arg1: memref<8x128xf32, #tpu.memory_space<vmem>>, %arg2: memref<128x128xf32, #tpu.memory_space<vmem>>, %arg3: memref<1x128xf32, #tpu.memory_space<vmem>>, %arg4: memref<128x128xf32, #tpu.memory_space<vmem>>, %arg5: memref<1x128xf32, #tpu.memory_space<vmem>>, %arg6: memref<128x128xf32, #tpu.memory_space<vmem>>, %arg7: memref<1x128xf32, #tpu.memory_space<vmem>>, %arg8: memref<128x128xf32, #tpu.memory_space<vmem>>, %arg9: memref<1x128xf32, #tpu.memory_space<vmem>>, %arg10: memref<8x128xf32, #tpu.memory_space<vmem>>, %arg11: memref<8x128xf32, #tpu.memory_space<vmem>>) attributes {dimension_semantics = [#tpu.dimension_semantics<parallel>], iteration_bounds = array<i64: 1>, scalar_prefetch = 0 : i64, scratch_operands = 0 : i64, tpu.core_type = #tpu.core_type<tc>, window_params = [{transform_indices = @transform_0, window_bounds = array<i64: 8, 128>}, {pipeline_mode = #tpu.pipeline_mode<synchronous>, transform_indices = @transform_1, window_bounds = array<i64: 128, 128>}, {pipeline_mode = #tpu.pipeline_mode<synchronous>, transform_indices = @transform_2, window_bounds = array<i64: 1, 128>}, {pipeline_mode = #tpu.pipeline_mode<synchronous>, transform_indices = @transform_3, window_bounds = array<i64: 128, 128>}, {pipeline_mode = #tpu.pipeline_mode<synchronous>, transform_indices = @transform_4, window_bounds = array<i64: 1, 128>}, {pipeline_mode = #tpu.pipeline_mode<synchronous>, transform_indices = @transform_5, window_bounds = array<i64: 128, 128>}, {pipeline_mode = #tpu.pipeline_mode<synchronous>, transform_indices = @transform_6, window_bounds = array<i64: 1, 128>}, {pipeline_mode = #tpu.pipeline_mode<synchronous>, transform_indices = @transform_7, window_bounds = array<i64: 128, 128>}, {pipeline_mode = #tpu.pipeline_mode<synchronous>, transform_indices = @transform_8, window_bounds = array<i64: 1, 128>}, {transform_indices = @transform_9, window_bounds = array<i64: 8, 128>}, {transform_indices = @transform_10, window_bounds = array<i64: 8, 128>}]} {
    %c0 = arith.constant 0 : index
    %c0_0 = arith.constant 0 : index
    %0 = vector.load %arg1[%c0, %c0_0] : memref<8x128xf32, #tpu.memory_space<vmem>>, vector<8x128xf32>
    %c0_1 = arith.constant 0 : index
    %c0_2 = arith.constant 0 : index
    %1 = vector.load %arg2[%c0_1, %c0_2] : memref<128x128xf32, #tpu.memory_space<vmem>>, vector<128x128xf32>
    %cst = arith.constant dense<0.000000e+00> : vector<8x128xf32>
    %2 = tpu.matmul %0, %1, %cst {dimension_numbers = #tpu.dot_dimension_numbers<[1], [0], [0], [1], [0, 0, 1, 1], [], []>} : vector<8x128xf32>, vector<128x128xf32>, vector<8x128xf32> -> vector<8x128xf32>
    %c0_3 = arith.constant 0 : index
    %c0_4 = arith.constant 0 : index
    %3 = vector.load %arg3[%c0_3, %c0_4] : memref<1x128xf32, #tpu.memory_space<vmem>>, vector<1x128xf32>
    %4 = vector.broadcast %3 : vector<1x128xf32> to vector<8x128xf32>
    %5 = arith.addf %2, %4 : vector<8x128xf32>
    %cst_5 = arith.constant 0.000000e+00 : f32
    %6 = vector.broadcast %cst_5 : f32 to vector<8x128xf32>
    %7 = arith.maximumf %5, %6 : vector<8x128xf32>
    %c0_6 = arith.constant 0 : index
    %c0_7 = arith.constant 0 : index
    %8 = vector.load %arg4[%c0_6, %c0_7] : memref<128x128xf32, #tpu.memory_space<vmem>>, vector<128x128xf32>
    %cst_8 = arith.constant dense<0.000000e+00> : vector<8x128xf32>
    %9 = tpu.matmul %7, %8, %cst_8 {dimension_numbers = #tpu.dot_dimension_numbers<[1], [0], [0], [1], [0, 0, 1, 1], [], []>} : vector<8x128xf32>, vector<128x128xf32>, vector<8x128xf32> -> vector<8x128xf32>
    %c0_9 = arith.constant 0 : index
    %c0_10 = arith.constant 0 : index
    %10 = vector.load %arg5[%c0_9, %c0_10] : memref<1x128xf32, #tpu.memory_space<vmem>>, vector<1x128xf32>
    %11 = vector.broadcast %10 : vector<1x128xf32> to vector<8x128xf32>
    %12 = arith.addf %9, %11 : vector<8x128xf32>
    %c0_11 = arith.constant 0 : index
    %c0_12 = arith.constant 0 : index
    %13 = vector.load %arg10[%c0_11, %c0_12] : memref<8x128xf32, #tpu.memory_space<vmem>>, vector<8x128xf32>
    tpu.vector_store %arg10[%c0_11, %c0_12], %12 {strides = array<i32>} : memref<8x128xf32, #tpu.memory_space<vmem>>, vector<8x128xf32>,
    %c0_13 = arith.constant 0 : index
    %c0_14 = arith.constant 0 : index
    %14 = vector.load %arg6[%c0_13, %c0_14] : memref<128x128xf32, #tpu.memory_space<vmem>>, vector<128x128xf32>
    %cst_15 = arith.constant dense<0.000000e+00> : vector<8x128xf32>
    %15 = tpu.matmul %12, %14, %cst_15 {dimension_numbers = #tpu.dot_dimension_numbers<[1], [0], [0], [1], [0, 0, 1, 1], [], []>} : vector<8x128xf32>, vector<128x128xf32>, vector<8x128xf32> -> vector<8x128xf32>
    %c0_16 = arith.constant 0 : index
    %c0_17 = arith.constant 0 : index
    %16 = vector.load %arg7[%c0_16, %c0_17] : memref<1x128xf32, #tpu.memory_space<vmem>>, vector<1x128xf32>
    %17 = vector.broadcast %16 : vector<1x128xf32> to vector<8x128xf32>
    %18 = arith.addf %15, %17 : vector<8x128xf32>
    %cst_18 = arith.constant 0.000000e+00 : f32
    %19 = vector.broadcast %cst_18 : f32 to vector<8x128xf32>
    %20 = arith.maximumf %18, %19 : vector<8x128xf32>
    %c0_19 = arith.constant 0 : index
    %c0_20 = arith.constant 0 : index
    %21 = vector.load %arg8[%c0_19, %c0_20] : memref<128x128xf32, #tpu.memory_space<vmem>>, vector<128x128xf32>
    %cst_21 = arith.constant dense<0.000000e+00> : vector<8x128xf32>
    %22 = tpu.matmul %20, %21, %cst_21 {dimension_numbers = #tpu.dot_dimension_numbers<[1], [0], [0], [1], [0, 0, 1, 1], [], []>} : vector<8x128xf32>, vector<128x128xf32>, vector<8x128xf32> -> vector<8x128xf32>
    %c0_22 = arith.constant 0 : index
    %c0_23 = arith.constant 0 : index
    %23 = vector.load %arg9[%c0_22, %c0_23] : memref<1x128xf32, #tpu.memory_space<vmem>>, vector<1x128xf32>
    %24 = vector.broadcast %23 : vector<1x128xf32> to vector<8x128xf32>
    %25 = arith.addf %22, %24 : vector<8x128xf32>
    %c0_24 = arith.constant 0 : index
    %c0_25 = arith.constant 0 : index
    %26 = vector.load %arg11[%c0_24, %c0_25] : memref<8x128xf32, #tpu.memory_space<vmem>>, vector<8x128xf32>
    tpu.vector_store %arg11[%c0_24, %c0_25], %25 {strides = array<i32>} : memref<8x128xf32, #tpu.memory_space<vmem>>, vector<8x128xf32>,
    return
  }
  func.func @transform_0(%arg0: i32) -> (i32, i32) {
    %c0_i32 = arith.constant 0 : i32
    %c0_i32_0 = arith.constant 0 : i32
    return %arg0, %c0_i32 : i32, i32
  }
  func.func @transform_1(%arg0: i32) -> (i32, i32) {
    %c0_i32 = arith.constant 0 : i32
    %c0_i32_0 = arith.constant 0 : i32
    %c0_i32_1 = arith.constant 0 : i32
    return %c0_i32, %c0_i32_0 : i32, i32
  }
  func.func @transform_2(%arg0: i32) -> (i32, i32) {
    %c0_i32 = arith.constant 0 : i32
    %c0_i32_0 = arith.constant 0 : i32
    %c0_i32_1 = arith.constant 0 : i32
    return %c0_i32, %c0_i32_0 : i32, i32
  }
  func.func @transform_3(%arg0: i32) -> (i32, i32) {
    %c0_i32 = arith.constant 0 : i32
    %c0_i32_0 = arith.constant 0 : i32
    %c0_i32_1 = arith.constant 0 : i32
    return %c0_i32, %c0_i32_0 : i32, i32
  }
  func.func @transform_4(%arg0: i32) -> (i32, i32) {
    %c0_i32 = arith.constant 0 : i32
    %c0_i32_0 = arith.constant 0 : i32
    %c0_i32_1 = arith.constant 0 : i32
    return %c0_i32, %c0_i32_0 : i32, i32
  }
  func.func @transform_5(%arg0: i32) -> (i32, i32) {
    %c0_i32 = arith.constant 0 : i32
    %c0_i32_0 = arith.constant 0 : i32
    %c0_i32_1 = arith.constant 0 : i32
    return %c0_i32, %c0_i32_0 : i32, i32
  }
  func.func @transform_6(%arg0: i32) -> (i32, i32) {
    %c0_i32 = arith.constant 0 : i32
    %c0_i32_0 = arith.constant 0 : i32
    %c0_i32_1 = arith.constant 0 : i32
    return %c0_i32, %c0_i32_0 : i32, i32
  }
  func.func @transform_7(%arg0: i32) -> (i32, i32) {
    %c0_i32 = arith.constant 0 : i32
    %c0_i32_0 = arith.constant 0 : i32
    %c0_i32_1 = arith.constant 0 : i32
    return %c0_i32, %c0_i32_0 : i32, i32
  }
  func.func @transform_8(%arg0: i32) -> (i32, i32) {
    %c0_i32 = arith.constant 0 : i32
    %c0_i32_0 = arith.constant 0 : i32
    %c0_i32_1 = arith.constant 0 : i32
    return %c0_i32, %c0_i32_0 : i32, i32
  }
  func.func @transform_9(%arg0: i32) -> (i32, i32) {
    %c0_i32 = arith.constant 0 : i32
    %c0_i32_0 = arith.constant 0 : i32
    return %arg0, %c0_i32 : i32, i32
  }
  func.func @transform_10(%arg0: i32) -> (i32, i32) {
    %c0_i32 = arith.constant 0 : i32
    %c0_i32_0 = arith.constant 0 : i32
    return %arg0, %c0_i32 : i32, i32
  }
}

</mosaic_0001>

<llo_original>
// kernel: tpu_custom_call.1
$region0: #{tpu_custom_call.1}
  #allocation0 [shape = 'u32[]', space=smem, size = 0x4, offset = 0x4, fixed_abs, tag = 'smem constant byte address 0x4 - core index']
  #allocation1 [shape = 'u32[144,128]{1,0:T(1,128)}', space=vmem, size = 0x12000, scoped, tag = 'internal scratch']
  %s0 = inlined_call_operand.hbm [shape: f32[8,128], index: 0, kind: input, shape index: {}]
  %s1 = inlined_call_operand.hbm [shape: f32[128,128], index: 1, kind: input, shape index: {}]
  %s2 = inlined_call_operand.vmem [shape: f32[1,128], index: 2, kind: input, shape index: {}]
  %s3 = inlined_call_operand.hbm [shape: f32[128,128], index: 3, kind: input, shape index: {}]
  %s4 = inlined_call_operand.vmem [shape: f32[1,128], index: 4, kind: input, shape index: {}]
  %s5 = inlined_call_operand.hbm [shape: f32[128,128], index: 5, kind: input, shape index: {}]
  %s6 = inlined_call_operand.vmem [shape: f32[1,128], index: 6, kind: input, shape index: {}]
  %s7 = inlined_call_operand.hbm [shape: f32[128,128], index: 7, kind: input, shape index: {}]
  %s8 = inlined_call_operand.vmem [shape: f32[1,128], index: 8, kind: input, shape index: {}]
  %s9 = inlined_call_operand.hbm [shape: f32[8,128], index: 9, kind: output, shape index: {0}]
  %s10 = inlined_call_operand.hbm [shape: f32[8,128], index: 10, kind: output, shape index: {1}]
  %11 = xla_tuple %s9, %s10
  %s12 = sld [smem:[#allocation0]]
  $region74: #{tpu_custom_call.1} parent=0
    _
  %s14 = ssub.s32 1, %s12
  %s15 = scalar_select 0, %s14, %s12
  $region1: #{tpu_custom_call.1} parent=0
    #allocation2 [shape = 'u8[4096]{0}', space=vmem, size = 0x1000, scoped, tag = 'input window, operand 0, single buffered']
    #allocation3 [shape = 's32[1]{0}', space=sflag, size = 0x4, scoped, tag = 'scoped memory for tpu_custom_call.1']
    #allocation4 [shape = 's32[1]{0}', space=sflag, size = 0x4, scoped, tag = 'scoped memory for tpu_custom_call.1']
    #allocation5 [shape = 'u8[65536]{0}', space=vmem, size = 0x10000, scoped, tag = 'input window, operand 1, single buffered']
    #allocation6 [shape = 's32[1]{0}', space=sflag, size = 0x4, scoped, tag = 'scoped memory for tpu_custom_call.1']
    #allocation7 [shape = 'u8[65536]{0}', space=vmem, size = 0x10000, scoped, tag = 'input window, operand 3, single buffered']
    #allocation8 [shape = 'u8[65536]{0}', space=vmem, size = 0x10000, scoped, tag = 'input window, operand 5, single buffered']
    #allocation9 [shape = 's32[1]{0}', space=sflag, size = 0x4, scoped, tag = 'scoped memory for tpu_custom_call.1']
    #allocation10 [shape = 'u8[65536]{0}', space=vmem, size = 0x10000, scoped, tag = 'input window, operand 7, single buffered']
    #allocation11 [shape = 'u8[4096]{0}', space=vmem, size = 0x1000, scoped, tag = 'output window, operand 0, single buffered']
    #allocation12 [shape = 'u8[4096]{0}', space=vmem, size = 0x1000, scoped, tag = 'output window, operand 1, single buffered']
    #allocation13 [shape = 's32[1]{0}', space=sflag, size = 0x4, scoped, tag = 'scoped memory for tpu_custom_call.1']
    %16 = vsyncpa [#allocation3], 0
    %17 = vsyncpa [#allocation6], 0
    %18 = vsyncpa [#allocation9], 0
    %19 = vsyncpa [#allocation4], 0
    %20 = vsyncpa [#allocation13], 0
    // Predicated region
    $region2: #{tpu_custom_call.1} parent=1 // pred_check
      _
    $region3: #{tpu_custom_call.1} parent=1 // pred_check_branch
      %22 = sbr.rel (0) target = $region5
    $region4: #{tpu_custom_call.1} parent=1 // pred_region
      %s24 = ssub.s32 128, 128
      %25 = vsyncadd [#allocation3], %s24
      %s27 = sshll.u32 [#allocation2], 4
      %s28 = int_to_ptr.vmem [resolvable:$true] %s27
      %30 = dma.hbm_to_vmem [thread:$0]  %s0, 128, %s28, [#allocation3]
    $region5: #{tpu_custom_call.1} parent=1 // pred_fallthru
      _
    // Predicated region
    $region6: #{tpu_custom_call.1} parent=1 // pred_check
      _
    $region7: #{tpu_custom_call.1} parent=1 // pred_check_branch
      %32 = sbr.rel (0) target = $region9
    $region8: #{tpu_custom_call.1} parent=1 // pred_region
      %s34 = ssub.s32 2048, 2048
      %35 = vsyncadd [#allocation6], %s34
      %s36 = sshll.u32 [#allocation5], 4
      %s37 = int_to_ptr.vmem [resolvable:$true] %s36
      %42 = dma.hbm_to_vmem [thread:$0]  %s1, 2048, %s37, [#allocation6], 128, 128, 8
    $region9: #{tpu_custom_call.1} parent=1 // pred_fallthru
      _
    // Predicated region
    $region10: #{tpu_custom_call.1} parent=1 // pred_check
      _
    $region11: #{tpu_custom_call.1} parent=1 // pred_check_branch
      %44 = sbr.rel (0) target = $region13
    $region12: #{tpu_custom_call.1} parent=1 // pred_region
      _
    $region13: #{tpu_custom_call.1} parent=1 // pred_fallthru
      _
    // Predicated region
    $region14: #{tpu_custom_call.1} parent=1 // pred_check
      _
    $region15: #{tpu_custom_call.1} parent=1 // pred_check_branch
      %46 = sbr.rel (0) target = $region17
    $region16: #{tpu_custom_call.1} parent=1 // pred_region
      %s48 = ssub.s32 2048, 2048
      %49 = vsyncadd [#allocation6], %s48
      %s50 = sshll.u32 [#allocation7], 4
      %s51 = int_to_ptr.vmem [resolvable:$true] %s50
      %56 = dma.hbm_to_vmem [thread:$0]  %s3, 2048, %s51, [#allocation6], 128, 128, 8
    $region17: #{tpu_custom_call.1} parent=1 // pred_fallthru
      _
    // Predicated region
    $region18: #{tpu_custom_call.1} parent=1 // pred_check
      _
    $region19: #{tpu_custom_call.1} parent=1 // pred_check_branch
      %58 = sbr.rel (0) target = $region21
    $region20: #{tpu_custom_call.1} parent=1 // pred_region
      _
    $region21: #{tpu_custom_call.1} parent=1 // pred_fallthru
      _
    // Predicated region
    $region22: #{tpu_custom_call.1} parent=1 // pred_check
      _
    $region23: #{tpu_custom_call.1} parent=1 // pred_check_branch
      %60 = sbr.rel (0) target = $region25
    $region24: #{tpu_custom_call.1} parent=1 // pred_region
      %s62 = ssub.s32 2048, 2048
      %63 = vsyncadd [#allocation9], %s62
      %s64 = sshll.u32 [#allocation8], 4
      %s65 = int_to_ptr.vmem [resolvable:$true] %s64
      %70 = dma.hbm_to_vmem [thread:$0]  %s5, 2048, %s65, [#allocation9], 128, 128, 8
    $region25: #{tpu_custom_call.1} parent=1 // pred_fallthru
      _
    // Predicated region
    $region26: #{tpu_custom_call.1} parent=1 // pred_check
      _
    $region27: #{tpu_custom_call.1} parent=1 // pred_check_branch
      %72 = sbr.rel (0) target = $region29
    $region28: #{tpu_custom_call.1} parent=1 // pred_region
      _
    $region29: #{tpu_custom_call.1} parent=1 // pred_fallthru
      _
    // Predicated region
    $region30: #{tpu_custom_call.1} parent=1 // pred_check
      _
    $region31: #{tpu_custom_call.1} parent=1 // pred_check_branch
      %74 = sbr.rel (0) target = $region33
    $region32: #{tpu_custom_call.1} parent=1 // pred_region
      %s76 = ssub.s32 2048, 2048
      %77 = vsyncadd [#allocation9], %s76
      %s78 = sshll.u32 [#allocation10], 4
      %s79 = int_to_ptr.vmem [resolvable:$true] %s78
      %84 = dma.hbm_to_vmem [thread:$0]  %s7, 2048, %s79, [#allocation9], 128, 128, 8
    $region33: #{tpu_custom_call.1} parent=1 // pred_fallthru
      _
    // Predicated region
    $region34: #{tpu_custom_call.1} parent=1 // pred_check
      _
    $region35: #{tpu_custom_call.1} parent=1 // pred_check_branch
      %86 = sbr.rel (0) target = $region37
    $region36: #{tpu_custom_call.1} parent=1 // pred_region
      _
    $region37: #{tpu_custom_call.1} parent=1 // pred_fallthru
      _
    // Predicated region
    $region38: #{tpu_custom_call.1} parent=1 // pred_check
      _
    $region39: #{tpu_custom_call.1} parent=1 // pred_check_branch
      %88 = sbr.rel (0) target = $region41
    $region40: #{tpu_custom_call.1} parent=1 // pred_region
      %89 = dma.done [#allocation3], 128
    $region41: #{tpu_custom_call.1} parent=1 // pred_fallthru
      _
    // Predicated region
    $region42: #{tpu_custom_call.1} parent=1 // pred_check
      _
    $region43: #{tpu_custom_call.1} parent=1 // pred_check_branch
      %91 = sbr.rel (0) target = $region45
    $region44: #{tpu_custom_call.1} parent=1 // pred_region
      %92 = dma.done [#allocation6], 2048
    $region45: #{tpu_custom_call.1} parent=1 // pred_fallthru
      _
    // Predicated region
    $region46: #{tpu_custom_call.1} parent=1 // pred_check
      _
    $region47: #{tpu_custom_call.1} parent=1 // pred_check_branch
      %94 = sbr.rel (0) target = $region49
    $region48: #{tpu_custom_call.1} parent=1 // pred_region
      %95 = dma.done [#allocation6], 2048
    $region49: #{tpu_custom_call.1} parent=1 // pred_fallthru
      _
    // Predicated region
    $region50: #{tpu_custom_call.1} parent=1 // pred_check
      _
    $region51: #{tpu_custom_call.1} parent=1 // pred_check_branch
      %97 = sbr.rel (0) target = $region53
    $region52: #{tpu_custom_call.1} parent=1 // pred_region
      %98 = dma.done [#allocation9], 2048
    $region53: #{tpu_custom_call.1} parent=1 // pred_fallthru
      _
    // Predicated region
    $region54: #{tpu_custom_call.1} parent=1 // pred_check
      _
    $region55: #{tpu_custom_call.1} parent=1 // pred_check_branch
      %100 = sbr.rel (0) target = $region57
    $region56: #{tpu_custom_call.1} parent=1 // pred_region
      %101 = dma.done [#allocation9], 2048
    $region57: #{tpu_custom_call.1} parent=1 // pred_fallthru
      _
    %v102 = vld [vmem:[#allocation2] sm:$0xff]
    %v103 = vld [vmem:[#allocation5] sm:$0xff]
    %v104 = vld [vmem:[#allocation5 + $0x8] sm:$0xff]
    %v105 = vld [vmem:[#allocation5 + $0x10] sm:$0xff]
    %v106 = vld [vmem:[#allocation5 + $0x18] sm:$0xff]
    %v107 = vld [vmem:[#allocation5 + $0x20] sm:$0xff]
    %v108 = vld [vmem:[#allocation5 + $0x28] sm:$0xff]
    %v109 = vld [vmem:[#allocation5 + $0x30] sm:$0xff]
    %v110 = vld [vmem:[#allocation5 + $0x38] sm:$0xff]
    %v111 = vld [vmem:[#allocation5 + $0x40] sm:$0xff]
    %v112 = vld [vmem:[#allocation5 + $0x48] sm:$0xff]
    %v113 = vld [vmem:[#allocation5 + $0x50] sm:$0xff]
    %v114 = vld [vmem:[#allocation5 + $0x58] sm:$0xff]
    %v115 = vld [vmem:[#allocation5 + $0x60] sm:$0xff]
    %v116 = vld [vmem:[#allocation5 + $0x68] sm:$0xff]
    %v117 = vld [vmem:[#allocation5 + $0x70] sm:$0xff]
    %v118 = vld [vmem:[#allocation5 + $0x78] sm:$0xff]
    %v119 = vld [vmem:[%s2] sm:$0x1]
    %v121 = vlaneseq
    %v122 = vshrl.u32 %v121, 7
    %v123 = vsub.s32 0, %v122
    %v124 = vrot.slane %v119, %v123
    %126 = vmatprep.subr.mxu0 0.0
    %127 = vmatpush1.msra.mxu0 %v103
    %128 = vmatprep.subr.mxu0 0.0
    %129 = vmatpush1.msra.mxu0 %v104
    %130 = vmatprep.subr.mxu0 0.0
    %131 = vmatpush1.msra.mxu0 %v105
    %132 = vmatprep.subr.mxu0 0.0
    %133 = vmatpush1.msra.mxu0 %v106
    %134 = vmatprep.subr.mxu0 0.0
    %135 = vmatpush1.msra.mxu0 %v107
    %136 = vmatprep.subr.mxu0 0.0
    %137 = vmatpush1.msra.mxu0 %v108
    %138 = vmatprep.subr.mxu0 0.0
    %139 = vmatpush1.msra.mxu0 %v109
    %140 = vmatprep.subr.mxu0 0.0
    %141 = vmatpush1.msra.mxu0 %v110
    %142 = vmatprep.subr.mxu0 0.0
    %143 = vmatpush1.msra.mxu0 %v111
    %144 = vmatprep.subr.mxu0 0.0
    %145 = vmatpush1.msra.mxu0 %v112
    %146 = vmatprep.subr.mxu0 0.0
    %147 = vmatpush1.msra.mxu0 %v113
    %148 = vmatprep.subr.mxu0 0.0
    %149 = vmatpush1.msra.mxu0 %v114
    %150 = vmatprep.subr.mxu0 0.0
    %151 = vmatpush1.msra.mxu0 %v115
    %152 = vmatprep.subr.mxu0 0.0
    %153 = vmatpush1.msra.mxu0 %v116
    %154 = vmatprep.subr.mxu0 0.0
    %155 = vmatpush1.msra.mxu0 %v117
    %156 = vmatprep.subr.mxu0 0.0
    %157 = vmatpush1.msra.mxu0 %v118
    %158 = vmatprep.subr.mxu0 0.0
    %159 = vmatpush1.msra.mxu0 0.0
    %160 = vmatprep.subr.mxu0 0.0
    %161 = vmatpush1.msra.mxu0 0.0
    %162 = vmatprep.subr.mxu0 0.0
    %163 = vmatpush1.msra.mxu0 0.0
    %164 = vmatprep.subr.mxu0 0.0
    %165 = vmatpush1.msra.mxu0 0.0
    %166 = vmatprep.subr.mxu0 0.0
    %167 = vmatpush1.msra.mxu0 0.0
    %168 = vmatprep.subr.mxu0 0.0
    %169 = vmatpush1.msra.mxu0 0.0
    %170 = vmatprep.subr.mxu0 0.0
    %171 = vmatpush1.msra.mxu0 0.0
    %172 = vmatprep.subr.mxu0 0.0
    %173 = vmatpush1.msra.mxu0 0.0
    %174 = vmatprep.subr.mxu0 0.0
    %175 = vmatpush1.msra.mxu0 0.0
    %176 = vmatprep.subr.mxu0 0.0
    %177 = vmatpush1.msra.mxu0 0.0
    %178 = vmatprep.subr.mxu0 0.0
    %179 = vmatpush1.msra.mxu0 0.0
    %180 = vmatprep.subr.mxu0 0.0
    %181 = vmatpush1.msra.mxu0 0.0
    %182 = vmatprep.subr.mxu0 0.0
    %183 = vmatpush1.msra.mxu0 0.0
    %184 = vmatprep.subr.mxu0 0.0
    %185 = vmatpush1.msra.mxu0 0.0
    %186 = vmatprep.subr.mxu0 0.0
    %187 = vmatpush1.msra.mxu0 0.0
    %188 = vmatprep.subr.mxu0 0.0
    %189 = vmatpush1.msra.mxu0 0.0
    %190 = vmatprep.mubr.f32.mxu0 0.0
    %191 = vmatmul.mubr.f32.gmra.mrb[0].mxu0 %v102
    %v192 = vpop.f32.mrb[0].mxu0
    %v193 = vadd.f32 %v124, %v192
    %v194 = vpop.f32.mrb[0].mxu0
    %195 = vdwg.mxu0
    %v196 = vmax.f32 %v193, 0.0
    %v197 = vld [vmem:[#allocation7] sm:$0xff]
    %v198 = vld [vmem:[#allocation7 + $0x8] sm:$0xff]
    %v199 = vld [vmem:[#allocation7 + $0x10] sm:$0xff]
    %v200 = vld [vmem:[#allocation7 + $0x18] sm:$0xff]
    %v201 = vld [vmem:[#allocation7 + $0x20] sm:$0xff]
    %v202 = vld [vmem:[#allocation7 + $0x28] sm:$0xff]
    %v203 = vld [vmem:[#allocation7 + $0x30] sm:$0xff]
    %v204 = vld [vmem:[#allocation7 + $0x38] sm:$0xff]
    %v205 = vld [vmem:[#allocation7 + $0x40] sm:$0xff]
    %v206 = vld [vmem:[#allocation7 + $0x48] sm:$0xff]
    %v207 = vld [vmem:[#allocation7 + $0x50] sm:$0xff]
    %v208 = vld [vmem:[#allocation7 + $0x58] sm:$0xff]
    %v209 = vld [vmem:[#allocation7 + $0x60] sm:$0xff]
    %v210 = vld [vmem:[#allocation7 + $0x68] sm:$0xff]
    %v211 = vld [vmem:[#allocation7 + $0x70] sm:$0xff]
    %v212 = vld [vmem:[#allocation7 + $0x78] sm:$0xff]
    %v213 = vld [vmem:[%s4] sm:$0x1]
    %v215 = vlaneseq
    %v216 = vshrl.u32 %v215, 7
    %v217 = vsub.s32 0, %v216
    %v218 = vrot.slane %v213, %v217
    %220 = vmatprep.subr.mxu0 0.0
    %221 = vmatpush1.msra.mxu0 %v197
    %222 = vmatprep.subr.mxu0 0.0
    %223 = vmatpush1.msra.mxu0 %v198
    %224 = vmatprep.subr.mxu0 0.0
    %225 = vmatpush1.msra.mxu0 %v199
    %226 = vmatprep.subr.mxu0 0.0
    %227 = vmatpush1.msra.mxu0 %v200
    %228 = vmatprep.subr.mxu0 0.0
    %229 = vmatpush1.msra.mxu0 %v201
    %230 = vmatprep.subr.mxu0 0.0
    %231 = vmatpush1.msra.mxu0 %v202
    %232 = vmatprep.subr.mxu0 0.0
    %233 = vmatpush1.msra.mxu0 %v203
    %234 = vmatprep.subr.mxu0 0.0
    %235 = vmatpush1.msra.mxu0 %v204
    %236 = vmatprep.subr.mxu0 0.0
    %237 = vmatpush1.msra.mxu0 %v205
    %238 = vmatprep.subr.mxu0 0.0
    %239 = vmatpush1.msra.mxu0 %v206
    %240 = vmatprep.subr.mxu0 0.0
    %241 = vmatpush1.msra.mxu0 %v207
    %242 = vmatprep.subr.mxu0 0.0
    %243 = vmatpush1.msra.mxu0 %v208
    %244 = vmatprep.subr.mxu0 0.0
    %245 = vmatpush1.msra.mxu0 %v209
    %246 = vmatprep.subr.mxu0 0.0
    %247 = vmatpush1.msra.mxu0 %v210
    %248 = vmatprep.subr.mxu0 0.0
    %249 = vmatpush1.msra.mxu0 %v211
    %250 = vmatprep.subr.mxu0 0.0
    %251 = vmatpush1.msra.mxu0 %v212
    %252 = vmatprep.subr.mxu0 0.0
    %253 = vmatpush1.msra.mxu0 0.0
    %254 = vmatprep.subr.mxu0 0.0
    %255 = vmatpush1.msra.mxu0 0.0
    %256 = vmatprep.subr.mxu0 0.0
    %257 = vmatpush1.msra.mxu0 0.0
    %258 = vmatprep.subr.mxu0 0.0
    %259 = vmatpush1.msra.mxu0 0.0
    %260 = vmatprep.subr.mxu0 0.0
    %261 = vmatpush1.msra.mxu0 0.0
    %262 = vmatprep.subr.mxu0 0.0
    %263 = vmatpush1.msra.mxu0 0.0
    %264 = vmatprep.subr.mxu0 0.0
    %265 = vmatpush1.msra.mxu0 0.0
    %266 = vmatprep.subr.mxu0 0.0
    %267 = vmatpush1.msra.mxu0 0.0
    %268 = vmatprep.subr.mxu0 0.0
    %269 = vmatpush1.msra.mxu0 0.0
    %270 = vmatprep.subr.mxu0 0.0
    %271 = vmatpush1.msra.mxu0 0.0
    %272 = vmatprep.subr.mxu0 0.0
    %273 = vmatpush1.msra.mxu0 0.0
    %274 = vmatprep.subr.mxu0 0.0
    %275 = vmatpush1.msra.mxu0 0.0
    %276 = vmatprep.subr.mxu0 0.0
    %277 = vmatpush1.msra.mxu0 0.0
    %278 = vmatprep.subr.mxu0 0.0
    %279 = vmatpush1.msra.mxu0 0.0
    %280 = vmatprep.subr.mxu0 0.0
    %281 = vmatpush1.msra.mxu0 0.0
    %282 = vmatprep.subr.mxu0 0.0
    %283 = vmatpush1.msra.mxu0 0.0
    %284 = vmatprep.mubr.f32.mxu0 0.0
    %285 = vmatmul.mubr.f32.gmra.mrb[0].mxu0 %v196
    %v286 = vpop.f32.mrb[0].mxu0
    %v287 = vadd.f32 %v218, %v286
    %v288 = vpop.f32.mrb[0].mxu0
    %289 = vdwg.mxu0
    %290 = vst [vmem:[#allocation11] sm:$0xff] %v287
    %v291 = vld [vmem:[#allocation8] sm:$0xff]
    %v292 = vld [vmem:[#allocation8 + $0x8] sm:$0xff]
    %v293 = vld [vmem:[#allocation8 + $0x10] sm:$0xff]
    %v294 = vld [vmem:[#allocation8 + $0x18] sm:$0xff]
    %v295 = vld [vmem:[#allocation8 + $0x20] sm:$0xff]
    %v296 = vld [vmem:[#allocation8 + $0x28] sm:$0xff]
    %v297 = vld [vmem:[#allocation8 + $0x30] sm:$0xff]
    %v298 = vld [vmem:[#allocation8 + $0x38] sm:$0xff]
    %v299 = vld [vmem:[#allocation8 + $0x40] sm:$0xff]
    %v300 = vld [vmem:[#allocation8 + $0x48] sm:$0xff]
    %v301 = vld [vmem:[#allocation8 + $0x50] sm:$0xff]
    %v302 = vld [vmem:[#allocation8 + $0x58] sm:$0xff]
    %v303 = vld [vmem:[#allocation8 + $0x60] sm:$0xff]
    %v304 = vld [vmem:[#allocation8 + $0x68] sm:$0xff]
    %v305 = vld [vmem:[#allocation8 + $0x70] sm:$0xff]
    %v306 = vld [vmem:[#allocation8 + $0x78] sm:$0xff]
    %v307 = vld [vmem:[%s6] sm:$0x1]
    %v309 = vlaneseq
    %v310 = vshrl.u32 %v309, 7
    %v311 = vsub.s32 0, %v310
    %v312 = vrot.slane %v307, %v311
    %314 = vmatprep.subr.mxu0 0.0
    %315 = vmatpush1.msra.mxu0 %v291
    %316 = vmatprep.subr.mxu0 0.0
    %317 = vmatpush1.msra.mxu0 %v292
    %318 = vmatprep.subr.mxu0 0.0
    %319 = vmatpush1.msra.mxu0 %v293
    %320 = vmatprep.subr.mxu0 0.0
    %321 = vmatpush1.msra.mxu0 %v294
    %322 = vmatprep.subr.mxu0 0.0
    %323 = vmatpush1.msra.mxu0 %v295
    %324 = vmatprep.subr.mxu0 0.0
    %325 = vmatpush1.msra.mxu0 %v296
    %326 = vmatprep.subr.mxu0 0.0
    %327 = vmatpush1.msra.mxu0 %v297
    %328 = vmatprep.subr.mxu0 0.0
    %329 = vmatpush1.msra.mxu0 %v298
    %330 = vmatprep.subr.mxu0 0.0
    %331 = vmatpush1.msra.mxu0 %v299
    %332 = vmatprep.subr.mxu0 0.0
    %333 = vmatpush1.msra.mxu0 %v300
    %334 = vmatprep.subr.mxu0 0.0
    %335 = vmatpush1.msra.mxu0 %v301
    %336 = vmatprep.subr.mxu0 0.0
    %337 = vmatpush1.msra.mxu0 %v302
    %338 = vmatprep.subr.mxu0 0.0
    %339 = vmatpush1.msra.mxu0 %v303
    %340 = vmatprep.subr.mxu0 0.0
    %341 = vmatpush1.msra.mxu0 %v304
    %342 = vmatprep.subr.mxu0 0.0
    %343 = vmatpush1.msra.mxu0 %v305
    %344 = vmatprep.subr.mxu0 0.0
    %345 = vmatpush1.msra.mxu0 %v306
    %346 = vmatprep.subr.mxu0 0.0
    %347 = vmatpush1.msra.mxu0 0.0
    %348 = vmatprep.subr.mxu0 0.0
    %349 = vmatpush1.msra.mxu0 0.0
    %350 = vmatprep.subr.mxu0 0.0
    %351 = vmatpush1.msra.mxu0 0.0
    %352 = vmatprep.subr.mxu0 0.0
    %353 = vmatpush1.msra.mxu0 0.0
    %354 = vmatprep.subr.mxu0 0.0
    %355 = vmatpush1.msra.mxu0 0.0
    %356 = vmatprep.subr.mxu0 0.0
    %357 = vmatpush1.msra.mxu0 0.0
    %358 = vmatprep.subr.mxu0 0.0
    %359 = vmatpush1.msra.mxu0 0.0
    %360 = vmatprep.subr.mxu0 0.0
    %361 = vmatpush1.msra.mxu0 0.0
    %362 = vmatprep.subr.mxu0 0.0
    %363 = vmatpush1.msra.mxu0 0.0
    %364 = vmatprep.subr.mxu0 0.0
    %365 = vmatpush1.msra.mxu0 0.0
    %366 = vmatprep.subr.mxu0 0.0
    %367 = vmatpush1.msra.mxu0 0.0
    %368 = vmatprep.subr.mxu0 0.0
    %369 = vmatpush1.msra.mxu0 0.0
    %370 = vmatprep.subr.mxu0 0.0
    %371 = vmatpush1.msra.mxu0 0.0
    %372 = vmatprep.subr.mxu0 0.0
    %373 = vmatpush1.msra.mxu0 0.0
    %374 = vmatprep.subr.mxu0 0.0
    %375 = vmatpush1.msra.mxu0 0.0
    %376 = vmatprep.subr.mxu0 0.0
    %377 = vmatpush1.msra.mxu0 0.0
    %378 = vmatprep.mubr.f32.mxu0 0.0
    %379 = vmatmul.mubr.f32.gmra.mrb[0].mxu0 %v287
    %v380 = vpop.f32.mrb[0].mxu0
    %v381 = vadd.f32 %v312, %v380
    %v382 = vpop.f32.mrb[0].mxu0
    %383 = vdwg.mxu0
    %v384 = vmax.f32 %v381, 0.0
    %v385 = vld [vmem:[#allocation10] sm:$0xff]
    %v386 = vld [vmem:[#allocation10 + $0x8] sm:$0xff]
    %v387 = vld [vmem:[#allocation10 + $0x10] sm:$0xff]
    %v388 = vld [vmem:[#allocation10 + $0x18] sm:$0xff]
    %v389 = vld [vmem:[#allocation10 + $0x20] sm:$0xff]
    %v390 = vld [vmem:[#allocation10 + $0x28] sm:$0xff]
    %v391 = vld [vmem:[#allocation10 + $0x30] sm:$0xff]
    %v392 = vld [vmem:[#allocation10 + $0x38] sm:$0xff]
    %v393 = vld [vmem:[#allocation10 + $0x40] sm:$0xff]
    %v394 = vld [vmem:[#allocation10 + $0x48] sm:$0xff]
    %v395 = vld [vmem:[#allocation10 + $0x50] sm:$0xff]
    %v396 = vld [vmem:[#allocation10 + $0x58] sm:$0xff]
    %v397 = vld [vmem:[#allocation10 + $0x60] sm:$0xff]
    %v398 = vld [vmem:[#allocation10 + $0x68] sm:$0xff]
    %v399 = vld [vmem:[#allocation10 + $0x70] sm:$0xff]
    %v400 = vld [vmem:[#allocation10 + $0x78] sm:$0xff]
    %v401 = vld [vmem:[%s8] sm:$0x1]
    %v403 = vlaneseq
    %v404 = vshrl.u32 %v403, 7
    %v405 = vsub.s32 0, %v404
    %v406 = vrot.slane %v401, %v405
    %408 = vmatprep.subr.mxu0 0.0
    %409 = vmatpush1.msra.mxu0 %v385
    %410 = vmatprep.subr.mxu0 0.0
    %411 = vmatpush1.msra.mxu0 %v386
    %412 = vmatprep.subr.mxu0 0.0
    %413 = vmatpush1.msra.mxu0 %v387
    %414 = vmatprep.subr.mxu0 0.0
    %415 = vmatpush1.msra.mxu0 %v388
    %416 = vmatprep.subr.mxu0 0.0
    %417 = vmatpush1.msra.mxu0 %v389
    %418 = vmatprep.subr.mxu0 0.0
    %419 = vmatpush1.msra.mxu0 %v390
    %420 = vmatprep.subr.mxu0 0.0
    %421 = vmatpush1.msra.mxu0 %v391
    %422 = vmatprep.subr.mxu0 0.0
    %423 = vmatpush1.msra.mxu0 %v392
    %424 = vmatprep.subr.mxu0 0.0
    %425 = vmatpush1.msra.mxu0 %v393
    %426 = vmatprep.subr.mxu0 0.0
    %427 = vmatpush1.msra.mxu0 %v394
    %428 = vmatprep.subr.mxu0 0.0
    %429 = vmatpush1.msra.mxu0 %v395
    %430 = vmatprep.subr.mxu0 0.0
    %431 = vmatpush1.msra.mxu0 %v396
    %432 = vmatprep.subr.mxu0 0.0
    %433 = vmatpush1.msra.mxu0 %v397
    %434 = vmatprep.subr.mxu0 0.0
    %435 = vmatpush1.msra.mxu0 %v398
    %436 = vmatprep.subr.mxu0 0.0
    %437 = vmatpush1.msra.mxu0 %v399
    %438 = vmatprep.subr.mxu0 0.0
    %439 = vmatpush1.msra.mxu0 %v400
    %440 = vmatprep.subr.mxu0 0.0
    %441 = vmatpush1.msra.mxu0 0.0
    %442 = vmatprep.subr.mxu0 0.0
    %443 = vmatpush1.msra.mxu0 0.0
    %444 = vmatprep.subr.mxu0 0.0
    %445 = vmatpush1.msra.mxu0 0.0
    %446 = vmatprep.subr.mxu0 0.0
    %447 = vmatpush1.msra.mxu0 0.0
    %448 = vmatprep.subr.mxu0 0.0
    %449 = vmatpush1.msra.mxu0 0.0
    %450 = vmatprep.subr.mxu0 0.0
    %451 = vmatpush1.msra.mxu0 0.0
    %452 = vmatprep.subr.mxu0 0.0
    %453 = vmatpush1.msra.mxu0 0.0
    %454 = vmatprep.subr.mxu0 0.0
    %455 = vmatpush1.msra.mxu0 0.0
    %456 = vmatprep.subr.mxu0 0.0
    %457 = vmatpush1.msra.mxu0 0.0
    %458 = vmatprep.subr.mxu0 0.0
    %459 = vmatpush1.msra.mxu0 0.0
    %460 = vmatprep.subr.mxu0 0.0
    %461 = vmatpush1.msra.mxu0 0.0
    %462 = vmatprep.subr.mxu0 0.0
    %463 = vmatpush1.msra.mxu0 0.0
    %464 = vmatprep.subr.mxu0 0.0
    %465 = vmatpush1.msra.mxu0 0.0
    %466 = vmatprep.subr.mxu0 0.0
    %467 = vmatpush1.msra.mxu0 0.0
    %468 = vmatprep.subr.mxu0 0.0
    %469 = vmatpush1.msra.mxu0 0.0
    %470 = vmatprep.subr.mxu0 0.0
    %471 = vmatpush1.msra.mxu0 0.0
    %472 = vmatprep.mubr.f32.mxu0 0.0
    %473 = vmatmul.mubr.f32.gmra.mrb[0].mxu0 %v384
    %v474 = vpop.f32.mrb[0].mxu0
    %v475 = vadd.f32 %v406, %v474
    %v476 = vpop.f32.mrb[0].mxu0
    %477 = vdwg.mxu0
    %478 = vst [vmem:[#allocation12] sm:$0xff] %v475
    // Predicated region
    $region58: #{tpu_custom_call.1} parent=1 // pred_check
      _
    $region59: #{tpu_custom_call.1} parent=1 // pred_check_branch
      %480 = sbr.rel (0) target = $region61
    $region60: #{tpu_custom_call.1} parent=1 // pred_region
      %s482 = ssub.s32 128, 128
      %483 = vsyncadd [#allocation4], %s482
      %s485 = sshll.u32 [#allocation11], 4
      %s486 = int_to_ptr.vmem [resolvable:$true] %s485
      %488 = dma.vmem_to_hbm [thread:$0]  %s486, 128, %s9, [#allocation4]
    $region61: #{tpu_custom_call.1} parent=1 // pred_fallthru
      _
    // Predicated region
    $region62: #{tpu_custom_call.1} parent=1 // pred_check
      _
    $region63: #{tpu_custom_call.1} parent=1 // pred_check_branch
      %490 = sbr.rel (0) target = $region65
    $region64: #{tpu_custom_call.1} parent=1 // pred_region
      %s492 = ssub.s32 128, 128
      %493 = vsyncadd [#allocation13], %s492
      %s495 = sshll.u32 [#allocation12], 4
      %s496 = int_to_ptr.vmem [resolvable:$true] %s495
      %498 = dma.vmem_to_hbm [thread:$0]  %s496, 128, %s10, [#allocation13]
    $region65: #{tpu_custom_call.1} parent=1 // pred_fallthru
      _
    // Predicated region
    $region66: #{tpu_custom_call.1} parent=1 // pred_check
      _
    $region67: #{tpu_custom_call.1} parent=1 // pred_check_branch
      %500 = sbr.rel (0) target = $region69
    $region68: #{tpu_custom_call.1} parent=1 // pred_region
      %501 = dma.done [#allocation4], 128
    $region69: #{tpu_custom_call.1} parent=1 // pred_fallthru
      _
    // Predicated region
    $region70: #{tpu_custom_call.1} parent=1 // pred_check
      _
    $region71: #{tpu_custom_call.1} parent=1 // pred_check_branch
      %503 = sbr.rel (0) target = $region73
    $region72: #{tpu_custom_call.1} parent=1 // pred_region
      %504 = dma.done [#allocation13], 128
    $region73: #{tpu_custom_call.1} parent=1 // pred_fallthru
      _
    %505 = vsyncpa [#allocation3], 1
    %506 = vsyncpa [#allocation6], 1
    %507 = vsyncpa [#allocation9], 1
    %508 = vsyncpa [#allocation4], 1
    %509 = vsyncpa [#allocation13], 1

// kernel: tpu_custom_call.1
$region0: #{tpu_custom_call.1}
  #allocation0 [shape = 'u32[]', space=smem, size = 0x4, offset = 0x4, fixed_abs, tag = 'smem constant byte address 0x4 - core index']
  #allocation1 [shape = 'u32[144,128]{1,0:T(1,128)}', space=vmem, size = 0x12000, scoped, tag = 'internal scratch']
  %s0 = inlined_call_operand.hbm [shape: f32[8,128], index: 0, kind: input, shape index: {}]
  %s1 = inlined_call_operand.hbm [shape: f32[128,128], index: 1, kind: input, shape index: {}]
  %s2 = inlined_call_operand.vmem [shape: f32[1,128], index: 2, kind: input, shape index: {}]
  %s3 = inlined_call_operand.hbm [shape: f32[128,128], index: 3, kind: input, shape index: {}]
  %s4 = inlined_call_operand.vmem [shape: f32[1,128], index: 4, kind: input, shape index: {}]
  %s5 = inlined_call_operand.hbm [shape: f32[128,128], index: 5, kind: input, shape index: {}]
  %s6 = inlined_call_operand.vmem [shape: f32[1,128], index: 6, kind: input, shape index: {}]
  %s7 = inlined_call_operand.hbm [shape: f32[128,128], index: 7, kind: input, shape index: {}]
  %s8 = inlined_call_operand.vmem [shape: f32[1,128], index: 8, kind: input, shape index: {}]
  %s9 = inlined_call_operand.hbm [shape: f32[8,128], index: 9, kind: output, shape index: {0}]
  %s10 = inlined_call_operand.hbm [shape: f32[8,128], index: 10, kind: output, shape index: {1}]
  %11 = xla_tuple %s9, %s10
  %s12 = sld [smem:[#allocation0]]
  $region74: #{tpu_custom_call.1} parent=0
    _
  %s14 = ssub.s32 1, %s12
  %s15 = scalar_select 0, %s14, %s12
  $region1: #{tpu_custom_call.1} parent=0
    #allocation2 [shape = 'u8[4096]{0}', space=vmem, size = 0x1000, scoped, tag = 'input window, operand 0, single buffered']
    #allocation3 [shape = 's32[1]{0}', space=sflag, size = 0x4, scoped, tag = 'scoped memory for tpu_custom_call.1']
    #allocation4 [shape = 's32[1]{0}', space=sflag, size = 0x4, scoped, tag = 'scoped memory for tpu_custom_call.1']
    #allocation5 [shape = 'u8[65536]{0}', space=vmem, size = 0x10000, scoped, tag = 'input window, operand 1, single buffered']
    #allocation6 [shape = 's32[1]{0}', space=sflag, size = 0x4, scoped, tag = 'scoped memory for tpu_custom_call.1']
    #allocation7 [shape = 'u8[65536]{0}', space=vmem, size = 0x10000, scoped, tag = 'input window, operand 3, single buffered']
    #allocation8 [shape = 'u8[65536]{0}', space=vmem, size = 0x10000, scoped, tag = 'input window, operand 5, single buffered']
    #allocation9 [shape = 's32[1]{0}', space=sflag, size = 0x4, scoped, tag = 'scoped memory for tpu_custom_call.1']
    #allocation10 [shape = 'u8[65536]{0}', space=vmem, size = 0x10000, scoped, tag = 'input window, operand 7, single buffered']
    #allocation11 [shape = 'u8[4096]{0}', space=vmem, size = 0x1000, scoped, tag = 'output window, operand 0, single buffered']
    #allocation12 [shape = 'u8[4096]{0}', space=vmem, size = 0x1000, scoped, tag = 'output window, operand 1, single buffered']
    #allocation13 [shape = 's32[1]{0}', space=sflag, size = 0x4, scoped, tag = 'scoped memory for tpu_custom_call.1']
    %16 = vsyncpa [#allocation3], 0
    %17 = vsyncpa [#allocation6], 0
    %18 = vsyncpa [#allocation9], 0
    %19 = vsyncpa [#allocation4], 0
    %20 = vsyncpa [#allocation13], 0
    // Predicated region
    $region2: #{tpu_custom_call.1} parent=1 // pred_check
      _
    $region3: #{tpu_custom_call.1} parent=1 // pred_check_branch
      %22 = sbr.rel (0) target = $region5
    $region4: #{tpu_custom_call.1} parent=1 // pred_region
      %s24 = ssub.s32 128, 128
      %25 = vsyncadd [#allocation3], %s24
      %s27 = sshll.u32 [#allocation2], 4
      %s28 = int_to_ptr.vmem [resolvable:$true] %s27
      %30 = dma.hbm_to_vmem [thread:$0]  %s0, 128, %s28, [#allocation3]
    $region5: #{tpu_custom_call.1} parent=1 // pred_fallthru
      _
    // Predicated region
    $region6: #{tpu_custom_call.1} parent=1 // pred_check
      _
    $region7: #{tpu_custom_call.1} parent=1 // pred_check_branch
      %32 = sbr.rel (0) target = $region9
    $region8: #{tpu_custom_call.1} parent=1 // pred_region
      %s34 = ssub.s32 2048, 2048
      %35 = vsyncadd [#allocation6], %s34
      %s36 = sshll.u32 [#allocation5], 4
      %s37 = int_to_ptr.vmem [resolvable:$true] %s36
      %42 = dma.hbm_to_vmem [thread:$0]  %s1, 2048, %s37, [#allocation6], 128, 128, 8
    $region9: #{tpu_custom_call.1} parent=1 // pred_fallthru
      _
    // Predicated region
    $region10: #{tpu_custom_call.1} parent=1 // pred_check
      _
    $region11: #{tpu_custom_call.1} parent=1 // pred_check_branch
      %44 = sbr.rel (0) target = $region13
    $region12: #{tpu_custom_call.1} parent=1 // pred_region
      _
    $region13: #{tpu_custom_call.1} parent=1 // pred_fallthru
      _
    // Predicated region
    $region14: #{tpu_custom_call.1} parent=1 // pred_check
      _
    $region15: #{tpu_custom_call.1} parent=1 // pred_check_branch
      %46 = sbr.rel (0) target = $region17
    $region16: #{tpu_custom_call.1} parent=1 // pred_region
      %s48 = ssub.s32 2048, 2048
      %49 = vsyncadd [#allocation6], %s48
      %s50 = sshll.u32 [#allocation7], 4
      %s51 = int_to_ptr.vmem [resolvable:$true] %s50
      %56 = dma.hbm_to_vmem [thread:$0]  %s3, 2048, %s51, [#allocation6], 128, 128, 8
    $region17: #{tpu_custom_call.1} parent=1 // pred_fallthru
      _
    // Predicated region
    $region18: #{tpu_custom_call.1} parent=1 // pred_check
      _
    $region19: #{tpu_custom_call.1} parent=1 // pred_check_branch
      %58 = sbr.rel (0) target = $region21
    $region20: #{tpu_custom_call.1} parent=1 // pred_region
      _
    $region21: #{tpu_custom_call.1} parent=1 // pred_fallthru
      _
    // Predicated region
    $region22: #{tpu_custom_call.1} parent=1 // pred_check
      _
    $region23: #{tpu_custom_call.1} parent=1 // pred_check_branch
      %60 = sbr.rel (0) target = $region25
    $region24: #{tpu_custom_call.1} parent=1 // pred_region
      %s62 = ssub.s32 2048, 2048
      %63 = vsyncadd [#allocation9], %s62
      %s64 = sshll.u32 [#allocation8], 4
      %s65 = int_to_ptr.vmem [resolvable:$true] %s64
      %70 = dma.hbm_to_vmem [thread:$0]  %s5, 2048, %s65, [#allocation9], 128, 128, 8
    $region25: #{tpu_custom_call.1} parent=1 // pred_fallthru
      _
    // Predicated region
    $region26: #{tpu_custom_call.1} parent=1 // pred_check
      _
    $region27: #{tpu_custom_call.1} parent=1 // pred_check_branch
      %72 = sbr.rel (0) target = $region29
    $region28: #{tpu_custom_call.1} parent=1 // pred_region
      _
    $region29: #{tpu_custom_call.1} parent=1 // pred_fallthru
      _
    // Predicated region
    $region30: #{tpu_custom_call.1} parent=1 // pred_check
      _
    $region31: #{tpu_custom_call.1} parent=1 // pred_check_branch
      %74 = sbr.rel (0) target = $region33
    $region32: #{tpu_custom_call.1} parent=1 // pred_region
      %s76 = ssub.s32 2048, 2048
      %77 = vsyncadd [#allocation9], %s76
      %s78 = sshll.u32 [#allocation10], 4
      %s79 = int_to_ptr.vmem [resolvable:$true] %s78
      %84 = dma.hbm_to_vmem [thread:$0]  %s7, 2048, %s79, [#allocation9], 128, 128, 8
    $region33: #{tpu_custom_call.1} parent=1 // pred_fallthru
      _
    // Predicated region
    $region34: #{tpu_custom_call.1} parent=1 // pred_check
      _
    $region35: #{tpu_custom_call.1} parent=1 // pred_check_branch
      %86 = sbr.rel (0) target = $region37
    $region36: #{tpu_custom_call.1} parent=1 // pred_region
      _
    $region37: #{tpu_custom_call.1} parent=1 // pred_fallthru
      _
    // Predicated region
    $region38: #{tpu_custom_call.1} parent=1 // pred_check
      _
    $region39: #{tpu_custom_call.1} parent=1 // pred_check_branch
      %88 = sbr.rel (0) target = $region41
    $region40: #{tpu_custom_call.1} parent=1 // pred_region
      %89 = dma.done [#allocation3], 128
    $region41: #{tpu_custom_call.1} parent=1 // pred_fallthru
      _
    // Predicated region
    $region42: #{tpu_custom_call.1} parent=1 // pred_check
      _
    $region43: #{tpu_custom_call.1} parent=1 // pred_check_branch
      %91 = sbr.rel (0) target = $region45
    $region44: #{tpu_custom_call.1} parent=1 // pred_region
      %92 = dma.done [#allocation6], 2048
    $region45: #{tpu_custom_call.1} parent=1 // pred_fallthru
      _
    // Predicated region
    $region46: #{tpu_custom_call.1} parent=1 // pred_check
      _
    $region47: #{tpu_custom_call.1} parent=1 // pred_check_branch
      %94 = sbr.rel (0) target = $region49
    $region48: #{tpu_custom_call.1} parent=1 // pred_region
      %95 = dma.done [#allocation6], 2048
    $region49: #{tpu_custom_call.1} parent=1 // pred_fallthru
      _
    // Predicated region
    $region50: #{tpu_custom_call.1} parent=1 // pred_check
      _
    $region51: #{tpu_custom_call.1} parent=1 // pred_check_branch
      %97 = sbr.rel (0) target = $region53
    $region52: #{tpu_custom_call.1} parent=1 // pred_region
      %98 = dma.done [#allocation9], 2048
    $region53: #{tpu_custom_call.1} parent=1 // pred_fallthru
      _
    // Predicated region
    $region54: #{tpu_custom_call.1} parent=1 // pred_check
      _
    $region55: #{tpu_custom_call.1} parent=1 // pred_check_branch
      %100 = sbr.rel (0) target = $region57
    $region56: #{tpu_custom_call.1} parent=1 // pred_region
      %101 = dma.done [#allocation9], 2048
    $region57: #{tpu_custom_call.1} parent=1 // pred_fallthru
      _
    %v102 = vld [vmem:[#allocation2] sm:$0xff]
    %v103 = vld [vmem:[#allocation5] sm:$0xff]
    %v104 = vld [vmem:[#allocation5 + $0x8] sm:$0xff]
    %v105 = vld [vmem:[#allocation5 + $0x10] sm:$0xff]
    %v106 = vld [vmem:[#allocation5 + $0x18] sm:$0xff]
    %v107 = vld [vmem:[#allocation5 + $0x20] sm:$0xff]
    %v108 = vld [vmem:[#allocation5 + $0x28] sm:$0xff]
    %v109 = vld [vmem:[#allocation5 + $0x30] sm:$0xff]
    %v110 = vld [vmem:[#allocation5 + $0x38] sm:$0xff]
    %v111 = vld [vmem:[#allocation5 + $0x40] sm:$0xff]
    %v112 = vld [vmem:[#allocation5 + $0x48] sm:$0xff]
    %v113 = vld [vmem:[#allocation5 + $0x50] sm:$0xff]
    %v114 = vld [vmem:[#allocation5 + $0x58] sm:$0xff]
    %v115 = vld [vmem:[#allocation5 + $0x60] sm:$0xff]
    %v116 = vld [vmem:[#allocation5 + $0x68] sm:$0xff]
    %v117 = vld [vmem:[#allocation5 + $0x70] sm:$0xff]
    %v118 = vld [vmem:[#allocation5 + $0x78] sm:$0xff]
    %v119 = vld [vmem:[%s2] sm:$0x1]
    %v121 = vlaneseq
    %v122 = vshrl.u32 %v121, 7
    %v123 = vsub.s32 0, %v122
    %v124 = vrot.slane %v119, %v123
    %126 = vmatprep.subr.mxu0 0.0
    %127 = vmatpush1.msra.mxu0 %v103
    %128 = vmatprep.subr.mxu0 0.0
    %129 = vmatpush1.msra.mxu0 %v104
    %130 = vmatprep.subr.mxu0 0.0
    %131 = vmatpush1.msra.mxu0 %v105
    %132 = vmatprep.subr.mxu0 0.0
    %133 = vmatpush1.msra.mxu0 %v106
    %134 = vmatprep.subr.mxu0 0.0
    %135 = vmatpush1.msra.mxu0 %v107
    %136 = vmatprep.subr.mxu0 0.0
    %137 = vmatpush1.msra.mxu0 %v108
    %138 = vmatprep.subr.mxu0 0.0
    %139 = vmatpush1.msra.mxu0 %v109
    %140 = vmatprep.subr.mxu0 0.0
    %141 = vmatpush1.msra.mxu0 %v110
    %142 = vmatprep.subr.mxu0 0.0
    %143 = vmatpush1.msra.mxu0 %v111
    %144 = vmatprep.subr.mxu0 0.0
    %145 = vmatpush1.msra.mxu0 %v112
    %146 = vmatprep.subr.mxu0 0.0
    %147 = vmatpush1.msra.mxu0 %v113
    %148 = vmatprep.subr.mxu0 0.0
    %149 = vmatpush1.msra.mxu0 %v114
    %150 = vmatprep.subr.mxu0 0.0
    %151 = vmatpush1.msra.mxu0 %v115
    %152 = vmatprep.subr.mxu0 0.0
    %153 = vmatpush1.msra.mxu0 %v116
    %154 = vmatprep.subr.mxu0 0.0
    %155 = vmatpush1.msra.mxu0 %v117
    %156 = vmatprep.subr.mxu0 0.0
    %157 = vmatpush1.msra.mxu0 %v118
    %158 = vmatprep.subr.mxu0 0.0
    %159 = vmatpush1.msra.mxu0 0.0
    %160 = vmatprep.subr.mxu0 0.0
    %161 = vmatpush1.msra.mxu0 0.0
    %162 = vmatprep.subr.mxu0 0.0
    %163 = vmatpush1.msra.mxu0 0.0
    %164 = vmatprep.subr.mxu0 0.0
    %165 = vmatpush1.msra.mxu0 0.0
    %166 = vmatprep.subr.mxu0 0.0
    %167 = vmatpush1.msra.mxu0 0.0
    %168 = vmatprep.subr.mxu0 0.0
    %169 = vmatpush1.msra.mxu0 0.0
    %170 = vmatprep.subr.mxu0 0.0
    %171 = vmatpush1.msra.mxu0 0.0
    %172 = vmatprep.subr.mxu0 0.0
    %173 = vmatpush1.msra.mxu0 0.0
    %174 = vmatprep.subr.mxu0 0.0
    %175 = vmatpush1.msra.mxu0 0.0
    %176 = vmatprep.subr.mxu0 0.0
    %177 = vmatpush1.msra.mxu0 0.0
    %178 = vmatprep.subr.mxu0 0.0
    %179 = vmatpush1.msra.mxu0 0.0
    %180 = vmatprep.subr.mxu0 0.0
    %181 = vmatpush1.msra.mxu0 0.0
    %182 = vmatprep.subr.mxu0 0.0
    %183 = vmatpush1.msra.mxu0 0.0
    %184 = vmatprep.subr.mxu0 0.0
    %185 = vmatpush1.msra.mxu0 0.0
    %186 = vmatprep.subr.mxu0 0.0
    %187 = vmatpush1.msra.mxu0 0.0
    %188 = vmatprep.subr.mxu0 0.0
    %189 = vmatpush1.msra.mxu0 0.0
    %190 = vmatprep.mubr.f32.mxu0 0.0
    %191 = vmatmul.mubr.f32.gmra.mrb[0].mxu0 %v102
    %v192 = vpop.f32.mrb[0].mxu0
    %v193 = vadd.f32 %v124, %v192
    %v194 = vpop.f32.mrb[0].mxu0
    %195 = vdwg.mxu0
    %v196 = vmax.f32 %v193, 0.0
    %v197 = vld [vmem:[#allocation7] sm:$0xff]
    %v198 = vld [vmem:[#allocation7 + $0x8] sm:$0xff]
    %v199 = vld [vmem:[#allocation7 + $0x10] sm:$0xff]
    %v200 = vld [vmem:[#allocation7 + $0x18] sm:$0xff]
    %v201 = vld [vmem:[#allocation7 + $0x20] sm:$0xff]
    %v202 = vld [vmem:[#allocation7 + $0x28] sm:$0xff]
    %v203 = vld [vmem:[#allocation7 + $0x30] sm:$0xff]
    %v204 = vld [vmem:[#allocation7 + $0x38] sm:$0xff]
    %v205 = vld [vmem:[#allocation7 + $0x40] sm:$0xff]
    %v206 = vld [vmem:[#allocation7 + $0x48] sm:$0xff]
    %v207 = vld [vmem:[#allocation7 + $0x50] sm:$0xff]
    %v208 = vld [vmem:[#allocation7 + $0x58] sm:$0xff]
    %v209 = vld [vmem:[#allocation7 + $0x60] sm:$0xff]
    %v210 = vld [vmem:[#allocation7 + $0x68] sm:$0xff]
    %v211 = vld [vmem:[#allocation7 + $0x70] sm:$0xff]
    %v212 = vld [vmem:[#allocation7 + $0x78] sm:$0xff]
    %v213 = vld [vmem:[%s4] sm:$0x1]
    %v215 = vlaneseq
    %v216 = vshrl.u32 %v215, 7
    %v217 = vsub.s32 0, %v216
    %v218 = vrot.slane %v213, %v217
    %220 = vmatprep.subr.mxu0 0.0
    %221 = vmatpush1.msra.mxu0 %v197
    %222 = vmatprep.subr.mxu0 0.0
    %223 = vmatpush1.msra.mxu0 %v198
    %224 = vmatprep.subr.mxu0 0.0
    %225 = vmatpush1.msra.mxu0 %v199
    %226 = vmatprep.subr.mxu0 0.0
    %227 = vmatpush1.msra.mxu0 %v200
    %228 = vmatprep.subr.mxu0 0.0
    %229 = vmatpush1.msra.mxu0 %v201
    %230 = vmatprep.subr.mxu0 0.0
    %231 = vmatpush1.msra.mxu0 %v202
    %232 = vmatprep.subr.mxu0 0.0
    %233 = vmatpush1.msra.mxu0 %v203
    %234 = vmatprep.subr.mxu0 0.0
    %235 = vmatpush1.msra.mxu0 %v204
    %236 = vmatprep.subr.mxu0 0.0
    %237 = vmatpush1.msra.mxu0 %v205
    %238 = vmatprep.subr.mxu0 0.0
    %239 = vmatpush1.msra.mxu0 %v206
    %240 = vmatprep.subr.mxu0 0.0
    %241 = vmatpush1.msra.mxu0 %v207
    %242 = vmatprep.subr.mxu0 0.0
    %243 = vmatpush1.msra.mxu0 %v208
    %244 = vmatprep.subr.mxu0 0.0
    %245 = vmatpush1.msra.mxu0 %v209
    %246 = vmatprep.subr.mxu0 0.0
    %247 = vmatpush1.msra.mxu0 %v210
    %248 = vmatprep.subr.mxu0 0.0
    %249 = vmatpush1.msra.mxu0 %v211
    %250 = vmatprep.subr.mxu0 0.0
    %251 = vmatpush1.msra.mxu0 %v212
    %252 = vmatprep.subr.mxu0 0.0
    %253 = vmatpush1.msra.mxu0 0.0
    %254 = vmatprep.subr.mxu0 0.0
    %255 = vmatpush1.msra.mxu0 0.0
    %256 = vmatprep.subr.mxu0 0.0
    %257 = vmatpush1.msra.mxu0 0.0
    %258 = vmatprep.subr.mxu0 0.0
    %259 = vmatpush1.msra.mxu0 0.0
    %260 = vmatprep.subr.mxu0 0.0
    %261 = vmatpush1.msra.mxu0 0.0
    %262 = vmatprep.subr.mxu0 0.0
    %263 = vmatpush1.msra.mxu0 0.0
    %264 = vmatprep.subr.mxu0 0.0
    %265 = vmatpush1.msra.mxu0 0.0
    %266 = vmatprep.subr.mxu0 0.0
    %267 = vmatpush1.msra.mxu0 0.0
    %268 = vmatprep.subr.mxu0 0.0
    %269 = vmatpush1.msra.mxu0 0.0
    %270 = vmatprep.subr.mxu0 0.0
    %271 = vmatpush1.msra.mxu0 0.0
    %272 = vmatprep.subr.mxu0 0.0
    %273 = vmatpush1.msra.mxu0 0.0
    %274 = vmatprep.subr.mxu0 0.0
    %275 = vmatpush1.msra.mxu0 0.0
    %276 = vmatprep.subr.mxu0 0.0
    %277 = vmatpush1.msra.mxu0 0.0
    %278 = vmatprep.subr.mxu0 0.0
    %279 = vmatpush1.msra.mxu0 0.0
    %280 = vmatprep.subr.mxu0 0.0
    %281 = vmatpush1.msra.mxu0 0.0
    %282 = vmatprep.subr.mxu0 0.0
    %283 = vmatpush1.msra.mxu0 0.0
    %284 = vmatprep.mubr.f32.mxu0 0.0
    %285 = vmatmul.mubr.f32.gmra.mrb[0].mxu0 %v196
    %v286 = vpop.f32.mrb[0].mxu0
    %v287 = vadd.f32 %v218, %v286
    %v288 = vpop.f32.mrb[0].mxu0
    %289 = vdwg.mxu0
    %290 = vst [vmem:[#allocation11] sm:$0xff] %v287
    %v291 = vld [vmem:[#allocation8] sm:$0xff]
    %v292 = vld [vmem:[#allocation8 + $0x8] sm:$0xff]
    %v293 = vld [vmem:[#allocation8 + $0x10] sm:$0xff]
    %v294 = vld [vmem:[#allocation8 + $0x18] sm:$0xff]
    %v295 = vld [vmem:[#allocation8 + $0x20] sm:$0xff]
    %v296 = vld [vmem:[#allocation8 + $0x28] sm:$0xff]
    %v297 = vld [vmem:[#allocation8 + $0x30] sm:$0xff]
    %v298 = vld [vmem:[#allocation8 + $0x38] sm:$0xff]
    %v299 = vld [vmem:[#allocation8 + $0x40] sm:$0xff]
    %v300 = vld [vmem:[#allocation8 + $0x48] sm:$0xff]
    %v301 = vld [vmem:[#allocation8 + $0x50] sm:$0xff]
    %v302 = vld [vmem:[#allocation8 + $0x58] sm:$0xff]
    %v303 = vld [vmem:[#allocation8 + $0x60] sm:$0xff]
    %v304 = vld [vmem:[#allocation8 + $0x68] sm:$0xff]
    %v305 = vld [vmem:[#allocation8 + $0x70] sm:$0xff]
    %v306 = vld [vmem:[#allocation8 + $0x78] sm:$0xff]
    %v307 = vld [vmem:[%s6] sm:$0x1]
    %v309 = vlaneseq
    %v310 = vshrl.u32 %v309, 7
    %v311 = vsub.s32 0, %v310
    %v312 = vrot.slane %v307, %v311
    %314 = vmatprep.subr.mxu0 0.0
    %315 = vmatpush1.msra.mxu0 %v291
    %316 = vmatprep.subr.mxu0 0.0
    %317 = vmatpush1.msra.mxu0 %v292
    %318 = vmatprep.subr.mxu0 0.0
    %319 = vmatpush1.msra.mxu0 %v293
    %320 = vmatprep.subr.mxu0 0.0
    %321 = vmatpush1.msra.mxu0 %v294
    %322 = vmatprep.subr.mxu0 0.0
    %323 = vmatpush1.msra.mxu0 %v295
    %324 = vmatprep.subr.mxu0 0.0
    %325 = vmatpush1.msra.mxu0 %v296
    %326 = vmatprep.subr.mxu0 0.0
    %327 = vmatpush1.msra.mxu0 %v297
    %328 = vmatprep.subr.mxu0 0.0
    %329 = vmatpush1.msra.mxu0 %v298
    %330 = vmatprep.subr.mxu0 0.0
    %331 = vmatpush1.msra.mxu0 %v299
    %332 = vmatprep.subr.mxu0 0.0
    %333 = vmatpush1.msra.mxu0 %v300
    %334 = vmatprep.subr.mxu0 0.0
    %335 = vmatpush1.msra.mxu0 %v301
    %336 = vmatprep.subr.mxu0 0.0
    %337 = vmatpush1.msra.mxu0 %v302
    %338 = vmatprep.subr.mxu0 0.0
    %339 = vmatpush1.msra.mxu0 %v303
    %340 = vmatprep.subr.mxu0 0.0
    %341 = vmatpush1.msra.mxu0 %v304
    %342 = vmatprep.subr.mxu0 0.0
    %343 = vmatpush1.msra.mxu0 %v305
    %344 = vmatprep.subr.mxu0 0.0
    %345 = vmatpush1.msra.mxu0 %v306
    %346 = vmatprep.subr.mxu0 0.0
    %347 = vmatpush1.msra.mxu0 0.0
    %348 = vmatprep.subr.mxu0 0.0
    %349 = vmatpush1.msra.mxu0 0.0
    %350 = vmatprep.subr.mxu0 0.0
    %351 = vmatpush1.msra.mxu0 0.0
    %352 = vmatprep.subr.mxu0 0.0
    %353 = vmatpush1.msra.mxu0 0.0
    %354 = vmatprep.subr.mxu0 0.0
    %355 = vmatpush1.msra.mxu0 0.0
    %356 = vmatprep.subr.mxu0 0.0
    %357 = vmatpush1.msra.mxu0 0.0
    %358 = vmatprep.subr.mxu0 0.0
    %359 = vmatpush1.msra.mxu0 0.0
    %360 = vmatprep.subr.mxu0 0.0
    %361 = vmatpush1.msra.mxu0 0.0
    %362 = vmatprep.subr.mxu0 0.0
    %363 = vmatpush1.msra.mxu0 0.0
    %364 = vmatprep.subr.mxu0 0.0
    %365 = vmatpush1.msra.mxu0 0.0
    %366 = vmatprep.subr.mxu0 0.0
    %367 = vmatpush1.msra.mxu0 0.0
    %368 = vmatprep.subr.mxu0 0.0
    %369 = vmatpush1.msra.mxu0 0.0
    %370 = vmatprep.subr.mxu0 0.0
    %371 = vmatpush1.msra.mxu0 0.0
    %372 = vmatprep.subr.mxu0 0.0
    %373 = vmatpush1.msra.mxu0 0.0
    %374 = vmatprep.subr.mxu0 0.0
    %375 = vmatpush1.msra.mxu0 0.0
    %376 = vmatprep.subr.mxu0 0.0
    %377 = vmatpush1.msra.mxu0 0.0
    %378 = vmatprep.mubr.f32.mxu0 0.0
    %379 = vmatmul.mubr.f32.gmra.mrb[0].mxu0 %v287
    %v380 = vpop.f32.mrb[0].mxu0
    %v381 = vadd.f32 %v312, %v380
    %v382 = vpop.f32.mrb[0].mxu0
    %383 = vdwg.mxu0
    %v384 = vmax.f32 %v381, 0.0
    %v385 = vld [vmem:[#allocation10] sm:$0xff]
    %v386 = vld [vmem:[#allocation10 + $0x8] sm:$0xff]
    %v387 = vld [vmem:[#allocation10 + $0x10] sm:$0xff]
    %v388 = vld [vmem:[#allocation10 + $0x18] sm:$0xff]
    %v389 = vld [vmem:[#allocation10 + $0x20] sm:$0xff]
    %v390 = vld [vmem:[#allocation10 + $0x28] sm:$0xff]
    %v391 = vld [vmem:[#allocation10 + $0x30] sm:$0xff]
    %v392 = vld [vmem:[#allocation10 + $0x38] sm:$0xff]
    %v393 = vld [vmem:[#allocation10 + $0x40] sm:$0xff]
    %v394 = vld [vmem:[#allocation10 + $0x48] sm:$0xff]
    %v395 = vld [vmem:[#allocation10 + $0x50] sm:$0xff]
    %v396 = vld [vmem:[#allocation10 + $0x58] sm:$0xff]
    %v397 = vld [vmem:[#allocation10 + $0x60] sm:$0xff]
    %v398 = vld [vmem:[#allocation10 + $0x68] sm:$0xff]
    %v399 = vld [vmem:[#allocation10 + $0x70] sm:$0xff]
    %v400 = vld [vmem:[#allocation10 + $0x78] sm:$0xff]
    %v401 = vld [vmem:[%s8] sm:$0x1]
    %v403 = vlaneseq
    %v404 = vshrl.u32 %v403, 7
    %v405 = vsub.s32 0, %v404
    %v406 = vrot.slane %v401, %v405
    %408 = vmatprep.subr.mxu0 0.0
    %409 = vmatpush1.msra.mxu0 %v385
    %410 = vmatprep.subr.mxu0 0.0
    %411 = vmatpush1.msra.mxu0 %v386
    %412 = vmatprep.subr.mxu0 0.0
    %413 = vmatpush1.msra.mxu0 %v387
    %414 = vmatprep.subr.mxu0 0.0
    %415 = vmatpush1.msra.mxu0 %v388
    %416 = vmatprep.subr.mxu0 0.0
    %417 = vmatpush1.msra.mxu0 %v389
    %418 = vmatprep.subr.mxu0 0.0
    %419 = vmatpush1.msra.mxu0 %v390
    %420 = vmatprep.subr.mxu0 0.0
    %421 = vmatpush1.msra.mxu0 %v391
    %422 = vmatprep.subr.mxu0 0.0
    %423 = vmatpush1.msra.mxu0 %v392
    %424 = vmatprep.subr.mxu0 0.0
    %425 = vmatpush1.msra.mxu0 %v393
    %426 = vmatprep.subr.mxu0 0.0
    %427 = vmatpush1.msra.mxu0 %v394
    %428 = vmatprep.subr.mxu0 0.0
    %429 = vmatpush1.msra.mxu0 %v395
    %430 = vmatprep.subr.mxu0 0.0
    %431 = vmatpush1.msra.mxu0 %v396
    %432 = vmatprep.subr.mxu0 0.0
    %433 = vmatpush1.msra.mxu0 %v397
    %434 = vmatprep.subr.mxu0 0.0
    %435 = vmatpush1.msra.mxu0 %v398
    %436 = vmatprep.subr.mxu0 0.0
    %437 = vmatpush1.msra.mxu0 %v399
    %438 = vmatprep.subr.mxu0 0.0
    %439 = vmatpush1.msra.mxu0 %v400
    %440 = vmatprep.subr.mxu0 0.0
    %441 = vmatpush1.msra.mxu0 0.0
    %442 = vmatprep.subr.mxu0 0.0
    %443 = vmatpush1.msra.mxu0 0.0
    %444 = vmatprep.subr.mxu0 0.0
    %445 = vmatpush1.msra.mxu0 0.0
    %446 = vmatprep.subr.mxu0 0.0
    %447 = vmatpush1.msra.mxu0 0.0
    %448 = vmatprep.subr.mxu0 0.0
    %449 = vmatpush1.msra.mxu0 0.0
    %450 = vmatprep.subr.mxu0 0.0
    %451 = vmatpush1.msra.mxu0 0.0
    %452 = vmatprep.subr.mxu0 0.0
    %453 = vmatpush1.msra.mxu0 0.0
    %454 = vmatprep.subr.mxu0 0.0
    %455 = vmatpush1.msra.mxu0 0.0
    %456 = vmatprep.subr.mxu0 0.0
    %457 = vmatpush1.msra.mxu0 0.0
    %458 = vmatprep.subr.mxu0 0.0
    %459 = vmatpush1.msra.mxu0 0.0
    %460 = vmatprep.subr.mxu0 0.0
    %461 = vmatpush1.msra.mxu0 0.0
    %462 = vmatprep.subr.mxu0 0.0
    %463 = vmatpush1.msra.mxu0 0.0
    %464 = vmatprep.subr.mxu0 0.0
    %465 = vmatpush1.msra.mxu0 0.0
    %466 = vmatprep.subr.mxu0 0.0
    %467 = vmatpush1.msra.mxu0 0.0
    %468 = vmatprep.subr.mxu0 0.0
    %469 = vmatpush1.msra.mxu0 0.0
    %470 = vmatprep.subr.mxu0 0.0
    %471 = vmatpush1.msra.mxu0 0.0
    %472 = vmatprep.mubr.f32.mxu0 0.0
    %473 = vmatmul.mubr.f32.gmra.mrb[0].mxu0 %v384
    %v474 = vpop.f32.mrb[0].mxu0
    %v475 = vadd.f32 %v406, %v474
    %v476 = vpop.f32.mrb[0].mxu0
    %477 = vdwg.mxu0
    %478 = vst [vmem:[#allocation12] sm:$0xff] %v475
    // Predicated region
    $region58: #{tpu_custom_call.1} parent=1 // pred_check
      _
    $region59: #{tpu_custom_call.1} parent=1 // pred_check_branch
      %480 = sbr.rel (0) target = $region61
    $region60: #{tpu_custom_call.1} parent=1 // pred_region
      %s482 = ssub.s32 128, 128
      %483 = vsyncadd [#allocation4], %s482
      %s485 = sshll.u32 [#allocation11], 4
      %s486 = int_to_ptr.vmem [resolvable:$true] %s485
      %488 = dma.vmem_to_hbm [thread:$0]  %s486, 128, %s9, [#allocation4]
    $region61: #{tpu_custom_call.1} parent=1 // pred_fallthru
      _
    // Predicated region
    $region62: #{tpu_custom_call.1} parent=1 // pred_check
      _
    $region63: #{tpu_custom_call.1} parent=1 // pred_check_branch
      %490 = sbr.rel (0) target = $region65
    $region64: #{tpu_custom_call.1} parent=1 // pred_region
      %s492 = ssub.s32 128, 128
      %493 = vsyncadd [#allocation13], %s492
      %s495 = sshll.u32 [#allocation12], 4
      %s496 = int_to_ptr.vmem [resolvable:$true] %s495
      %498 = dma.vmem_to_hbm [thread:$0]  %s496, 128, %s10, [#allocation13]
    $region65: #{tpu_custom_call.1} parent=1 // pred_fallthru
      _
    // Predicated region
    $region66: #{tpu_custom_call.1} parent=1 // pred_check
      _
    $region67: #{tpu_custom_call.1} parent=1 // pred_check_branch
      %500 = sbr.rel (0) target = $region69
    $region68: #{tpu_custom_call.1} parent=1 // pred_region
      %501 = dma.done [#allocation4], 128
    $region69: #{tpu_custom_call.1} parent=1 // pred_fallthru
      _
    // Predicated region
    $region70: #{tpu_custom_call.1} parent=1 // pred_check
      _
    $region71: #{tpu_custom_call.1} parent=1 // pred_check_branch
      %503 = sbr.rel (0) target = $region73
    $region72: #{tpu_custom_call.1} parent=1 // pred_region
      %504 = dma.done [#allocation13], 128
    $region73: #{tpu_custom_call.1} parent=1 // pred_fallthru
      _
    %505 = vsyncpa [#allocation3], 1
    %506 = vsyncpa [#allocation6], 1
    %507 = vsyncpa [#allocation9], 1
    %508 = vsyncpa [#allocation4], 1
    %509 = vsyncpa [#allocation13], 1

</llo_original>
